<compile_context>
chip_gen: v6e
topology: v6e:2x2x1
jax: 0.10.0
libtpu: 0.0.40
codegen_flags: <defaults>
</compile_context>

<pallas_src>
import jax
import jax.numpy as jnp
from jax.experimental import pallas as pl
from jax.experimental.pallas import tpu as pltpu


def _pick_row_tile(h):
    """Largest preferred row tile that divides H and gives >= 2 tiles (pipeline depth)."""
    for th in (16, 8, 4, 2, 1):
        if h % th == 0 and h // th >= 2:
            return th
    return h


def _upsample_conv_kernel(x_ref, w_ref, b_ref, o_ref, im_ref):
    # x_ref : (1, H+2, W+2, Cp)   zero-padded original-res image (resident per n)
    # w_ref : (4, 4*Cp, Cp)       per-phase 2x2 weights, K laid out as (i, j, ci)
    # b_ref : (1, Cp)             bias, f32
    # o_ref : (1, TH, W, 4*Cp)    one row tile, phases stacked on the lane axis
    # im_ref: (TH+1, W+1, 4*Cp)   im2col scratch
    TH = o_ref.shape[1]
    W = o_ref.shape[2]
    Cp = w_ref.shape[2]

    h = pl.program_id(1)
    r0 = pl.multiple_of(h * TH, TH)

    # Build the 2x2 im2col slab once per tile:
    #   im_ref[r, q, (i*2+j)*Cp : (i*2+j+1)*Cp] = xpad[r0 + r + i, q + j, :]
    im_ref[:, :, 0 * Cp:1 * Cp] = x_ref[0, pl.ds(r0, TH + 1), 0:W + 1, :]
    im_ref[:, :, 1 * Cp:2 * Cp] = x_ref[0, pl.ds(r0, TH + 1), 1:W + 2, :]
    im_ref[:, :, 2 * Cp:3 * Cp] = x_ref[0, pl.ds(r0 + 1, TH + 1), 0:W + 1, :]
    im_ref[:, :, 3 * Cp:4 * Cp] = x_ref[0, pl.ds(r0 + 1, TH + 1), 1:W + 2, :]

    bias = b_ref[...]                                          # (1, Cp), f32

    for p in range(4):                                         # phase p = a*2 + b
        a, b = divmod(p, 2)
        slab = im_ref[a:a + TH, b:b + W, :].reshape(TH * W, 4 * Cp)
        acc = jax.lax.dot_general(
            slab, w_ref[p],
            dimension_numbers=(((1,), (0,)), ((), ())),
            preferred_element_type=jnp.float32)                # (TH*W, Cp), f32 accum
        acc = acc + bias
        o_ref[0, :, :, p * Cp:(p + 1) * Cp] = (
            acc.reshape(TH, W, Cp).astype(o_ref.dtype))


def upsample_forward(x_nchw, w_oihw, bias):
    """Matches PyTorch Upsample.forward: nearest 2x upsample then 3x3 conv (pad=1)."""
    N, C, H, W = x_nchw.shape
    Cp = ((C + 127) // 128) * 128           # lane-dense channel padding (no-op if C % 128 == 0)
    TH = _pick_row_tile(H)
    dtype = x_nchw.dtype

    # ---- fold the nearest-2x upsample into 4 per-phase 2x2 weight sets ----
    # y[n, co, 2*ph + a, 2*pw + b] = sum_{i,j in {0,1}} Wp[a,b,i,j] . x[n, :, ph+a+i-1, pw+b+j-1]
    wh = jnp.transpose(w_oihw, (2, 3, 1, 0)).astype(jnp.float32)      # (3, 3, Ci, Co)
    wp = jnp.zeros((2, 2, 2, 2, C, C), jnp.float32)                   # [a, b, i, j, ci, co]
    for a in range(2):
        for ky in range(3):
            i = (a + ky - 1) // 2 + (1 - a)
            for b in range(2):
                for kx in range(3):
                    j = (b + kx - 1) // 2 + (1 - b)
                    wp = wp.at[a, b, i, j].add(wh[ky, kx])
    wp = jnp.pad(wp, ((0, 0),) * 4 + ((0, Cp - C), (0, Cp - C)))
    wp = wp.reshape(4, 4 * Cp, Cp).astype(dtype)     # K flattened as (i, j, ci)
    b2d = jnp.pad(bias.astype(jnp.float32), (0, Cp - C)).reshape(1, Cp)

    # ---- input: NCHW -> NHWC, zero-pad 1 px spatially, pad channels to Cp (one fused pass) ----
    xp = jnp.transpose(x_nchw, (0, 2, 3, 1))
    xp = jnp.pad(xp, ((0, 0), (1, 1), (1, 1), (0, Cp - C)))

    itemsize = jnp.dtype(dtype).itemsize
    x_blk = (H + 2) * (W + 2) * Cp * itemsize
    o_blk = TH * W * 4 * Cp * itemsize
    w_blk = 4 * 4 * Cp * Cp * itemsize
    im_blk = (TH + 1) * (W + 1) * 4 * Cp * itemsize
    # double buffers + weights + scratch + headroom, capped under the v7x 64 MiB VMEM
    vmem_limit = int(min(max(2 * (x_blk + o_blk + w_blk) + 4 * im_blk + 4 * o_blk,
                             32 << 20), 48 << 20))

    out = pl.pallas_call(
        _upsample_conv_kernel,
        out_shape=jax.ShapeDtypeStruct((N, H, W, 4 * Cp), dtype),
        grid_spec=pltpu.PrefetchScalarGridSpec(
            num_scalar_prefetch=0,
            grid=(N, H // TH),
            in_specs=[
                pl.BlockSpec((1, H + 2, W + 2, Cp), lambda n, h: (n, 0, 0, 0)),
                pl.BlockSpec((4, 4 * Cp, Cp), lambda n, h: (0, 0, 0)),
                pl.BlockSpec((1, Cp), lambda n, h: (0, 0)),
            ],
            out_specs=pl.BlockSpec((1, TH, W, 4 * Cp), lambda n, h: (n, h, 0, 0)),
            scratch_shapes=[pltpu.VMEM((TH + 1, W + 1, 4 * Cp), dtype)],
        ),
        compiler_params=pltpu.CompilerParams(
            dimension_semantics=("parallel", "parallel"),
            vmem_limit_bytes=vmem_limit),
    )(xp, wp, b2d)

    # Interleave phases + restore NCHW in one fused XLA transpose, drop channel padding.
    out = out.reshape(N, H, W, 2, 2, Cp)
    out = jnp.transpose(out, (0, 5, 1, 3, 2, 4)).reshape(N, Cp, 2 * H, 2 * W)
    return out[:, :C]


if __name__ == "__main__":
    key = jax.random.PRNGKey(0)
    k_x, k_w, k_b = jax.random.split(key, 3)

    N, C, H, W = 2, 4, 16, 16
    x = jax.random.normal(k_x, (N, C, H, W), dtype=jnp.float32)
    # Conv2d(dim, dim, 3) parameters: weight (C, C, 3, 3), bias (C,)
    w = jax.random.normal(k_w, (C, C, 3, 3), dtype=jnp.float32) * 0.1
    b = jax.random.normal(k_b, (C,), dtype=jnp.float32) * 0.1

    fwd = jax.jit(upsample_forward)
    out = jax.block_until_ready(fwd(x, w, b))

    # Reference: nearest-2x upsample + 3x3 conv (mirrors PyTorch semantics).
    x_up = jnp.repeat(jnp.repeat(x, 2, axis=2), 2, axis=3)
    ref = jax.lax.conv_general_dilated(
        x_up, w, window_strides=(1, 1), padding=((1, 1), (1, 1)),
        dimension_numbers=("NCHW", "OIHW", "NCHW"),
        precision=jax.lax.Precision.HIGHEST) + b[None, :, None, None]

    assert out.shape == (N, C, 2 * H, 2 * W)
    assert jnp.allclose(out, ref, atol=1e-3, rtol=1e-3), float(jnp.max(jnp.abs(out - ref)))

    print("KERNEL_OK")
</pallas_src>

<mosaic_0001>
module attributes {stable_mosaic.version = 11 : i64} {
  func.func @_upsample_conv_kernel(%arg0: i32, %arg1: i32, %arg2: memref<1x18x18x128xf32, #tpu.memory_space<vmem>>, %arg3: memref<4x512x128xf32, #tpu.memory_space<vmem>>, %arg4: memref<1x128xf32, #tpu.memory_space<vmem>>, %arg5: memref<1x8x16x512xf32, #tpu.memory_space<vmem>>, %arg6: memref<9x17x512xf32, #tpu.memory_space<vmem>>) attributes {dimension_semantics = [#tpu.dimension_semantics<parallel>, #tpu.dimension_semantics<parallel>], iteration_bounds = array<i64: 2, 2>, scalar_prefetch = 0 : i64, scratch_operands = 1 : i64, tpu.core_type = #tpu.core_type<tc>, window_params = [{transform_indices = @transform_0, window_bounds = array<i64: 1, 18, 18, 128>}, {pipeline_mode = #tpu.pipeline_mode<synchronous>, transform_indices = @transform_1, window_bounds = array<i64: 4, 512, 128>}, {pipeline_mode = #tpu.pipeline_mode<synchronous>, transform_indices = @transform_2, window_bounds = array<i64: 1, 128>}, {transform_indices = @transform_3, window_bounds = array<i64: 1, 8, 16, 512>}]} {
    %c8_i32 = arith.constant 8 : i32
    %0 = arith.muli %arg1, %c8_i32 : i32
    %1 = tpu.assume_multiple %0, 8 : i32
    %c0 = arith.constant 0 : index
    %2 = arith.index_cast %1 : i32 to index
    %c0_0 = arith.constant 0 : index
    %c0_1 = arith.constant 0 : index
    %3 = vector.load %arg2[%c0, %2, %c0_0, %c0_1] : memref<1x18x18x128xf32, #tpu.memory_space<vmem>>, vector<1x9x17x128xf32>
    %4 = vector.shape_cast %3 : vector<1x9x17x128xf32> to vector<9x17x128xf32>
    %c0_2 = arith.constant 0 : index
    %c0_3 = arith.constant 0 : index
    %c0_4 = arith.constant 0 : index
    %5 = vector.load %arg6[%c0_2, %c0_3, %c0_4] : memref<9x17x512xf32, #tpu.memory_space<vmem>>, vector<9x17x128xf32>
    tpu.vector_store %arg6[%c0_2, %c0_3, %c0_4], %4 {strides = array<i32>} : memref<9x17x512xf32, #tpu.memory_space<vmem>>, vector<9x17x128xf32>,
    %c0_5 = arith.constant 0 : index
    %6 = arith.index_cast %1 : i32 to index
    %c1 = arith.constant 1 : index
    %c0_6 = arith.constant 0 : index
    %7 = vector.load %arg2[%c0_5, %6, %c1, %c0_6] : memref<1x18x18x128xf32, #tpu.memory_space<vmem>>, vector<1x9x17x128xf32>
    %8 = vector.shape_cast %7 : vector<1x9x17x128xf32> to vector<9x17x128xf32>
    %c0_7 = arith.constant 0 : index
    %c0_8 = arith.constant 0 : index
    %c128 = arith.constant 128 : index
    %9 = vector.load %arg6[%c0_7, %c0_8, %c128] : memref<9x17x512xf32, #tpu.memory_space<vmem>>, vector<9x17x128xf32>
    tpu.vector_store %arg6[%c0_7, %c0_8, %c128], %8 {strides = array<i32>} : memref<9x17x512xf32, #tpu.memory_space<vmem>>, vector<9x17x128xf32>,
    %c1_i32 = arith.constant 1 : i32
    %10 = arith.addi %1, %c1_i32 : i32
    %c0_9 = arith.constant 0 : index
    %11 = arith.index_cast %10 : i32 to index
    %c0_10 = arith.constant 0 : index
    %c0_11 = arith.constant 0 : index
    %12 = vector.load %arg2[%c0_9, %11, %c0_10, %c0_11] : memref<1x18x18x128xf32, #tpu.memory_space<vmem>>, vector<1x9x17x128xf32>
    %13 = vector.shape_cast %12 : vector<1x9x17x128xf32> to vector<9x17x128xf32>
    %c0_12 = arith.constant 0 : index
    %c0_13 = arith.constant 0 : index
    %c256 = arith.constant 256 : index
    %14 = vector.load %arg6[%c0_12, %c0_13, %c256] : memref<9x17x512xf32, #tpu.memory_space<vmem>>, vector<9x17x128xf32>
    tpu.vector_store %arg6[%c0_12, %c0_13, %c256], %13 {strides = array<i32>} : memref<9x17x512xf32, #tpu.memory_space<vmem>>, vector<9x17x128xf32>,
    %c1_i32_14 = arith.constant 1 : i32
    %15 = arith.addi %1, %c1_i32_14 : i32
    %c0_15 = arith.constant 0 : index
    %16 = arith.index_cast %15 : i32 to index
    %c1_16 = arith.constant 1 : index
    %c0_17 = arith.constant 0 : index
    %17 = vector.load %arg2[%c0_15, %16, %c1_16, %c0_17] : memref<1x18x18x128xf32, #tpu.memory_space<vmem>>, vector<1x9x17x128xf32>
    %18 = vector.shape_cast %17 : vector<1x9x17x128xf32> to vector<9x17x128xf32>
    %c0_18 = arith.constant 0 : index
    %c0_19 = arith.constant 0 : index
    %c384 = arith.constant 384 : index
    %19 = vector.load %arg6[%c0_18, %c0_19, %c384] : memref<9x17x512xf32, #tpu.memory_space<vmem>>, vector<9x17x128xf32>
    tpu.vector_store %arg6[%c0_18, %c0_19, %c384], %18 {strides = array<i32>} : memref<9x17x512xf32, #tpu.memory_space<vmem>>, vector<9x17x128xf32>,
    %c0_20 = arith.constant 0 : index
    %c0_21 = arith.constant 0 : index
    %20 = vector.load %arg4[%c0_20, %c0_21] : memref<1x128xf32, #tpu.memory_space<vmem>>, vector<1x128xf32>
    %c0_22 = arith.constant 0 : index
    %c0_23 = arith.constant 0 : index
    %c0_24 = arith.constant 0 : index
    %21 = vector.load %arg6[%c0_22, %c0_23, %c0_24] : memref<9x17x512xf32, #tpu.memory_space<vmem>>, vector<8x16x512xf32>
    %22 = vector.shape_cast %21 : vector<8x16x512xf32> to vector<128x512xf32>
    %c0_25 = arith.constant 0 : index
    %c0_26 = arith.constant 0 : index
    %c0_27 = arith.constant 0 : index
    %23 = vector.load %arg3[%c0_25, %c0_26, %c0_27] : memref<4x512x128xf32, #tpu.memory_space<vmem>>, vector<1x512x128xf32>
    %24 = vector.shape_cast %23 : vector<1x512x128xf32> to vector<512x128xf32>
    %cst = arith.constant dense<0.000000e+00> : vector<128x128xf32>
    %25 = tpu.matmul %22, %24, %cst {dimension_numbers = #tpu.dot_dimension_numbers<[1], [0], [0], [1], [0, 0, 1, 1], [], []>} : vector<128x512xf32>, vector<512x128xf32>, vector<128x128xf32> -> vector<128x128xf32>
    %26 = vector.broadcast %20 : vector<1x128xf32> to vector<128x128xf32>
    %27 = arith.addf %25, %26 : vector<128x128xf32>
    %28 = vector.shape_cast %27 : vector<128x128xf32> to vector<8x16x128xf32>
    %c0_28 = arith.constant 0 : index
    %c0_29 = arith.constant 0 : index
    %c0_30 = arith.constant 0 : index
    %c0_31 = arith.constant 0 : index
    %29 = vector.load %arg5[%c0_28, %c0_29, %c0_30, %c0_31] : memref<1x8x16x512xf32, #tpu.memory_space<vmem>>, vector<1x8x16x128xf32>
    %30 = vector.shape_cast %29 : vector<1x8x16x128xf32> to vector<8x16x128xf32>
    %31 = vector.shape_cast %28 : vector<8x16x128xf32> to vector<1x8x16x128xf32>
    tpu.vector_store %arg5[%c0_28, %c0_29, %c0_30, %c0_31], %31 {strides = array<i32>} : memref<1x8x16x512xf32, #tpu.memory_space<vmem>>, vector<1x8x16x128xf32>,
    %c0_32 = arith.constant 0 : index
    %c1_33 = arith.constant 1 : index
    %c0_34 = arith.constant 0 : index
    %32 = vector.load %arg6[%c0_32, %c1_33, %c0_34] : memref<9x17x512xf32, #tpu.memory_space<vmem>>, vector<8x16x512xf32>
    %33 = vector.shape_cast %32 : vector<8x16x512xf32> to vector<128x512xf32>
    %c1_35 = arith.constant 1 : index
    %c0_36 = arith.constant 0 : index
    %c0_37 = arith.constant 0 : index
    %34 = vector.load %arg3[%c1_35, %c0_36, %c0_37] : memref<4x512x128xf32, #tpu.memory_space<vmem>>, vector<1x512x128xf32>
    %35 = vector.shape_cast %34 : vector<1x512x128xf32> to vector<512x128xf32>
    %cst_38 = arith.constant dense<0.000000e+00> : vector<128x128xf32>
    %36 = tpu.matmul %33, %35, %cst_38 {dimension_numbers = #tpu.dot_dimension_numbers<[1], [0], [0], [1], [0, 0, 1, 1], [], []>} : vector<128x512xf32>, vector<512x128xf32>, vector<128x128xf32> -> vector<128x128xf32>
    %37 = vector.broadcast %20 : vector<1x128xf32> to vector<128x128xf32>
    %38 = arith.addf %36, %37 : vector<128x128xf32>
    %39 = vector.shape_cast %38 : vector<128x128xf32> to vector<8x16x128xf32>
    %c0_39 = arith.constant 0 : index
    %c0_40 = arith.constant 0 : index
    %c0_41 = arith.constant 0 : index
    %c128_42 = arith.constant 128 : index
    %40 = vector.load %arg5[%c0_39, %c0_40, %c0_41, %c128_42] : memref<1x8x16x512xf32, #tpu.memory_space<vmem>>, vector<1x8x16x128xf32>
    %41 = vector.shape_cast %40 : vector<1x8x16x128xf32> to vector<8x16x128xf32>
    %42 = vector.shape_cast %39 : vector<8x16x128xf32> to vector<1x8x16x128xf32>
    tpu.vector_store %arg5[%c0_39, %c0_40, %c0_41, %c128_42], %42 {strides = array<i32>} : memref<1x8x16x512xf32, #tpu.memory_space<vmem>>, vector<1x8x16x128xf32>,
    %c1_43 = arith.constant 1 : index
    %c0_44 = arith.constant 0 : index
    %c0_45 = arith.constant 0 : index
    %43 = vector.load %arg6[%c1_43, %c0_44, %c0_45] : memref<9x17x512xf32, #tpu.memory_space<vmem>>, vector<8x16x512xf32>
    %44 = vector.shape_cast %43 : vector<8x16x512xf32> to vector<128x512xf32>
    %c2 = arith.constant 2 : index
    %c0_46 = arith.constant 0 : index
    %c0_47 = arith.constant 0 : index
    %45 = vector.load %arg3[%c2, %c0_46, %c0_47] : memref<4x512x128xf32, #tpu.memory_space<vmem>>, vector<1x512x128xf32>
    %46 = vector.shape_cast %45 : vector<1x512x128xf32> to vector<512x128xf32>
    %cst_48 = arith.constant dense<0.000000e+00> : vector<128x128xf32>
    %47 = tpu.matmul %44, %46, %cst_48 {dimension_numbers = #tpu.dot_dimension_numbers<[1], [0], [0], [1], [0, 0, 1, 1], [], []>} : vector<128x512xf32>, vector<512x128xf32>, vector<128x128xf32> -> vector<128x128xf32>
    %48 = vector.broadcast %20 : vector<1x128xf32> to vector<128x128xf32>
    %49 = arith.addf %47, %48 : vector<128x128xf32>
    %50 = vector.shape_cast %49 : vector<128x128xf32> to vector<8x16x128xf32>
    %c0_49 = arith.constant 0 : index
    %c0_50 = arith.constant 0 : index
    %c0_51 = arith.constant 0 : index
    %c256_52 = arith.constant 256 : index
    %51 = vector.load %arg5[%c0_49, %c0_50, %c0_51, %c256_52] : memref<1x8x16x512xf32, #tpu.memory_space<vmem>>, vector<1x8x16x128xf32>
    %52 = vector.shape_cast %51 : vector<1x8x16x128xf32> to vector<8x16x128xf32>
    %53 = vector.shape_cast %50 : vector<8x16x128xf32> to vector<1x8x16x128xf32>
    tpu.vector_store %arg5[%c0_49, %c0_50, %c0_51, %c256_52], %53 {strides = array<i32>} : memref<1x8x16x512xf32, #tpu.memory_space<vmem>>, vector<1x8x16x128xf32>,
    %c1_53 = arith.constant 1 : index
    %c1_54 = arith.constant 1 : index
    %c0_55 = arith.constant 0 : index
    %54 = vector.load %arg6[%c1_53, %c1_54, %c0_55] : memref<9x17x512xf32, #tpu.memory_space<vmem>>, vector<8x16x512xf32>
    %55 = vector.shape_cast %54 : vector<8x16x512xf32> to vector<128x512xf32>
    %c3 = arith.constant 3 : index
    %c0_56 = arith.constant 0 : index
    %c0_57 = arith.constant 0 : index
    %56 = vector.load %arg3[%c3, %c0_56, %c0_57] : memref<4x512x128xf32, #tpu.memory_space<vmem>>, vector<1x512x128xf32>
    %57 = vector.shape_cast %56 : vector<1x512x128xf32> to vector<512x128xf32>
    %cst_58 = arith.constant dense<0.000000e+00> : vector<128x128xf32>
    %58 = tpu.matmul %55, %57, %cst_58 {dimension_numbers = #tpu.dot_dimension_numbers<[1], [0], [0], [1], [0, 0, 1, 1], [], []>} : vector<128x512xf32>, vector<512x128xf32>, vector<128x128xf32> -> vector<128x128xf32>
    %59 = vector.broadcast %20 : vector<1x128xf32> to vector<128x128xf32>
    %60 = arith.addf %58, %59 : vector<128x128xf32>
    %61 = vector.shape_cast %60 : vector<128x128xf32> to vector<8x16x128xf32>
    %c0_59 = arith.constant 0 : index
    %c0_60 = arith.constant 0 : index
    %c0_61 = arith.constant 0 : index
    %c384_62 = arith.constant 384 : index
    %62 = vector.load %arg5[%c0_59, %c0_60, %c0_61, %c384_62] : memref<1x8x16x512xf32, #tpu.memory_space<vmem>>, vector<1x8x16x128xf32>
    %63 = vector.shape_cast %62 : vector<1x8x16x128xf32> to vector<8x16x128xf32>
    %64 = vector.shape_cast %61 : vector<8x16x128xf32> to vector<1x8x16x128xf32>
    tpu.vector_store %arg5[%c0_59, %c0_60, %c0_61, %c384_62], %64 {strides = array<i32>} : memref<1x8x16x512xf32, #tpu.memory_space<vmem>>, vector<1x8x16x128xf32>,
    return
  }
  func.func @transform_0(%arg0: i32, %arg1: i32) -> (i32, i32, i32, i32) {
    %c0_i32 = arith.constant 0 : i32
    %c0_i32_0 = arith.constant 0 : i32
    %c0_i32_1 = arith.constant 0 : i32
    %c0_i32_2 = arith.constant 0 : i32
    return %arg0, %c0_i32, %c0_i32_0, %c0_i32_1 : i32, i32, i32, i32
  }
  func.func @transform_1(%arg0: i32, %arg1: i32) -> (i32, i32, i32) {
    %c0_i32 = arith.constant 0 : i32
    %c0_i32_0 = arith.constant 0 : i32
    %c0_i32_1 = arith.constant 0 : i32
    %c0_i32_2 = arith.constant 0 : i32
    return %c0_i32, %c0_i32_0, %c0_i32_1 : i32, i32, i32
  }
  func.func @transform_2(%arg0: i32, %arg1: i32) -> (i32, i32) {
    %c0_i32 = arith.constant 0 : i32
    %c0_i32_0 = arith.constant 0 : i32
    %c0_i32_1 = arith.constant 0 : i32
    return %c0_i32, %c0_i32_0 : i32, i32
  }
  func.func @transform_3(%arg0: i32, %arg1: i32) -> (i32, i32, i32, i32) {
    %c0_i32 = arith.constant 0 : i32
    %c0_i32_0 = arith.constant 0 : i32
    %c0_i32_1 = arith.constant 0 : i32
    return %arg0, %arg1, %c0_i32, %c0_i32_0 : i32, i32, i32, i32
  }
}

</mosaic_0001>

<llo_original>
// kernel: upsample_forward.1
$region0: #{upsample_forward.1}
  #allocation0 [shape = 'u32[]', space=smem, size = 0x4, offset = 0x4, fixed_abs, tag = 'smem constant byte address 0x4 - core index']
  #allocation1 [shape = 'u32[144,128]{1,0:T(1,128)}', space=vmem, size = 0x12000, scoped, tag = 'internal scratch']
  #allocation2 [shape = 'f32[9,17,512]{2,1,0:T(8,128)}', space=vmem, size = 0x6c000, scoped, tag = 'scratch operand']
  %s0 = inlined_call_operand.vmem [shape: f32[2,18,18,128], index: 0, kind: input, shape index: {}]
  %s1 = inlined_call_operand.vmem [shape: f32[4,512,128], index: 1, kind: input, shape index: {}]
  %s2 = inlined_call_operand.vmem [shape: f32[1,128], index: 2, kind: input, shape index: {}]
  %s3 = inlined_call_operand.vmem [shape: f32[2,16,16,512], index: 3, kind: output, shape index: {}]
  %s4 = sld [smem:[#allocation0]]
  $region45: #{upsample_forward.1} parent=0
    _
  %s6 = ssub.s32 1, %s4
  %s7 = scalar_select 0, %s6, %s4
  loop: start=0, step=1, limit=6
  $region2: #{upsample_forward.1} parent=0 // loop_pre_header
    _
  $region3: #{upsample_forward.1} parent=0 // loop_header
    %s9 = sphi 0, %s13
    %p10 = scmp.ge.s32.totalorder %s9, 6
    %s16 = sphi 0, %s28
    %s17 = sphi 0, %s24
    %s18 = sphi 0, %s16
    %s19 = sphi 0, %s17
    %s20 = sphi 0, %s18
    %s21 = sphi 0, %s19
    %s31 = sphi 0, %s33
    %s34 = sphi 0, %s31
    %s35 = sphi 0, %s34
    %s51 = sphi 0, %s35
    %s55 = sphi 0, %s55
    %s57 = sphi 0, %s55
    %s58 = sphi 0, %s57
    %s72 = sphi 0, %s58
    %s76 = sphi 0, %s76
    %s78 = sphi 0, %s76
    %s79 = sphi 0, %s78
    %s93 = sphi 0, %s79
    %s101 = sphi 0, %s103
    %s104 = sphi 0, %s101
    %s105 = sphi 0, %s104
    %s121 = sphi 0, %s105
  $region4: #{upsample_forward.1} parent=0 // loop_header_branch
    %12 = sbr.rel (%p10) target = $region8
  $region5: #{upsample_forward.1} parent=0 // loop_body
    %s14 = ssub.s32 %s9, 1
    %s15 = ssub.s32 %s9, 2
    %s22 = sadd.s32 1, %s17
    %p23 = scmp.ge.s32.totalorder %s22, 2
    %s24 = scalar_select %p23, 0, %s22
    %s25 = sadd.s32 1, %s16
    %s26 = scalar_select %p23, %s25, %s16
    %p27 = scmp.ge.s32.totalorder %s26, 2
    %s28 = scalar_select %p27, 0, %s26
    %s29 = ssub.s32 %s16, %s28
    %p30 = scmp.eq.s32.totalorder %s29, 0
    %s32 = sadd.s32 %s31, 1
    %s33 = scalar_select %p30, %s31, %s32
    %p36 = pneg %p30
    %p37 = scmp.eq.s32.totalorder %s9, 3
    %p38 = por %p36, %p37
    %p39 = scmp.ne.s32.totalorder %s31, %s34
    %p40 = scmp.eq.s32.totalorder %s9, 0
    %p41 = por %p39, %p40
    %p42 = scmp.ne.s32.totalorder %s31, %s34
    %p43 = scmp.eq.s32.totalorder %s14, 3
    %p44 = por %p42, %p43
    %p45 = scmp.ne.s32.totalorder %s34, %s35
    %p46 = scmp.eq.s32.totalorder %s14, 0
    %p47 = por %p45, %p46
    %p48 = scmp.ne.s32.totalorder %s34, %s35
    %p49 = scmp.eq.s32.totalorder %s15, 3
    %p50 = por %p48, %p49
    %p52 = scmp.ne.s32.totalorder %s35, %s51
    %p53 = scmp.eq.s32.totalorder %s15, 0
    %p54 = por %p52, %p53
    %s56 = sadd.s32 %s55, 1
    %p59 = scmp.eq.s32.totalorder %s9, 3
    %p60 = scmp.ne.s32.totalorder %s55, %s57
    %p61 = scmp.eq.s32.totalorder %s9, 0
    %p62 = por %p60, %p61
    %p63 = scmp.ne.s32.totalorder %s55, %s57
    %p64 = scmp.eq.s32.totalorder %s14, 3
    %p65 = por %p63, %p64
    %p66 = scmp.ne.s32.totalorder %s57, %s58
    %p67 = scmp.eq.s32.totalorder %s14, 0
    %p68 = por %p66, %p67
    %p69 = scmp.ne.s32.totalorder %s57, %s58
    %p70 = scmp.eq.s32.totalorder %s15, 3
    %p71 = por %p69, %p70
    %p73 = scmp.ne.s32.totalorder %s58, %s72
    %p74 = scmp.eq.s32.totalorder %s15, 0
    %p75 = por %p73, %p74
    %s77 = sadd.s32 %s76, 1
    %p80 = scmp.eq.s32.totalorder %s9, 3
    %p81 = scmp.ne.s32.totalorder %s76, %s78
    %p82 = scmp.eq.s32.totalorder %s9, 0
    %p83 = por %p81, %p82
    %p84 = scmp.ne.s32.totalorder %s76, %s78
    %p85 = scmp.eq.s32.totalorder %s14, 3
    %p86 = por %p84, %p85
    %p87 = scmp.ne.s32.totalorder %s78, %s79
    %p88 = scmp.eq.s32.totalorder %s14, 0
    %p89 = por %p87, %p88
    %p90 = scmp.ne.s32.totalorder %s78, %s79
    %p91 = scmp.eq.s32.totalorder %s15, 3
    %p92 = por %p90, %p91
    %p94 = scmp.ne.s32.totalorder %s79, %s93
    %p95 = scmp.eq.s32.totalorder %s15, 0
    %p96 = por %p94, %p95
    %s97 = ssub.s32 %s16, %s28
    %s98 = ssub.s32 %s17, %s24
    %s99 = sor.u32 %s97, %s98
    %p100 = scmp.eq.s32.totalorder %s99, 0
    %s102 = sadd.s32 %s101, 1
    %s103 = scalar_select %p100, %s101, %s102
    %p106 = pneg %p100
    %p107 = scmp.eq.s32.totalorder %s9, 3
    %p108 = por %p106, %p107
    %p109 = scmp.ne.s32.totalorder %s101, %s104
    %p110 = scmp.eq.s32.totalorder %s9, 0
    %p111 = por %p109, %p110
    %p112 = scmp.ne.s32.totalorder %s101, %s104
    %p113 = scmp.eq.s32.totalorder %s14, 3
    %p114 = por %p112, %p113
    %p115 = scmp.ne.s32.totalorder %s104, %s105
    %p116 = scmp.eq.s32.totalorder %s14, 0
    %p117 = por %p115, %p116
    %p118 = scmp.ne.s32.totalorder %s104, %s105
    %p119 = scmp.eq.s32.totalorder %s15, 3
    %p120 = por %p118, %p119
    %p122 = scmp.ne.s32.totalorder %s105, %s121
    %p123 = scmp.eq.s32.totalorder %s15, 0
    %p124 = por %p122, %p123
    %p125 = scmp.le.s32.totalorder 1, %s9
    %p126 = scmp.lt.s32.totalorder %s9, 5
    %p127 = pnand %p125, %p126
    %p128 = pneg %p127
    // Predicated region
    $region9: #{upsample_forward.1} parent=5 // pred_check
      _
    $region10: #{upsample_forward.1} parent=5 // pred_check_branch
      %130 = sbr.rel (%p127) target = $region12
    $region11: #{upsample_forward.1} parent=5 // pred_region
      %s131 = ssub.s32 %s9, 1
      // Predicated region
      $region13: #{upsample_forward.1} parent=11 // pred_check
        %p132 = pneg %p68
      $region14: #{upsample_forward.1} parent=11 // pred_check_branch
        %134 = sbr.rel (%p132) target = $region16
      $region15: #{upsample_forward.1} parent=11 // pred_region
        _
      $region16: #{upsample_forward.1} parent=11 // pred_fallthru
        _
      // Predicated region
      $region17: #{upsample_forward.1} parent=11 // pred_check
        %p135 = pneg %p89
      $region18: #{upsample_forward.1} parent=11 // pred_check_branch
        %137 = sbr.rel (%p135) target = $region20
      $region19: #{upsample_forward.1} parent=11 // pred_region
        _
      $region20: #{upsample_forward.1} parent=11 // pred_fallthru
        _
    $region12: #{upsample_forward.1} parent=5 // pred_fallthru
      _
    %p138 = scmp.lt.s32.totalorder %s9, 4
    // Predicated region
    $region21: #{upsample_forward.1} parent=5 // pred_check
      %p139 = pneg %p138
    $region22: #{upsample_forward.1} parent=5 // pred_check_branch
      %141 = sbr.rel (%p139) target = $region24
    $region23: #{upsample_forward.1} parent=5 // pred_region
      // Predicated region
      $region25: #{upsample_forward.1} parent=23 // pred_check
        %p142 = pneg %p41
      $region26: #{upsample_forward.1} parent=23 // pred_check_branch
        %144 = sbr.rel (%p142) target = $region28
      $region27: #{upsample_forward.1} parent=23 // pred_region
        %p145 = scmp.lt.s32.totalorder %s16, 1
        %s146 = scalar_select %p145, %s16, 1
        %s147 = smul.addr %s146, 54
        %s148 = smul.addr %s147, 8
        %s149 = scalar_lea.vmem %s0, %s148
      $region28: #{upsample_forward.1} parent=23 // pred_fallthru
        _
    $region24: #{upsample_forward.1} parent=5 // pred_fallthru
      _
    %p150 = scmp.le.s32.totalorder 1, %s9
    %p151 = scmp.lt.s32.totalorder %s9, 5
    %p152 = pnand %p150, %p151
    %p153 = pneg %p152
    // Predicated region
    $region29: #{upsample_forward.1} parent=5 // pred_check
      _
    $region30: #{upsample_forward.1} parent=5 // pred_check_branch
      %155 = sbr.rel (%p152) target = $region32
    $region31: #{upsample_forward.1} parent=5 // pred_region
      %s156 = ssub.s32 %s9, 1
      %p157 = scmp.lt.s32.totalorder %s18, 1
      %s158 = scalar_select %p157, %s18, 1
      %s159 = smul.addr %s158, 54
      %s160 = smul.addr %s159, 8
      %s161 = scalar_lea.vmem %s0, %s160
      %p162 = pneg %p47
      %p163 = pneg %p44
      %p164 = pneg %p68
      %p165 = pneg %p65
      %p166 = pneg %p89
      %p167 = pneg %p86
      %p168 = pneg %p117
      %p169 = pneg %p114
      %s170 = smul.u32 8, %s19
      %p171 = scmp.lt.s32.totalorder %s18, 1
      %s172 = scalar_select %p171, %s18, 1
      %p173 = scmp.lt.s32.totalorder %s170, 15
      %s174 = scalar_select %p173, %s170, 15
      %s175 = smul.addr %s174, 8
      %s176 = smul.addr %s172, 128
      %s177 = sadd.s32 %s175, %s176
      %s178 = smul.addr %s177, 8
      %s179 = scalar_lea.vmem %s3, %s178
      %p180 = scmp.lt.s32.totalorder %s18, 1
      %s181 = scalar_select %p180, %s18, 1
      %s182 = smul.addr %s181, 54
      %s183 = smul.addr %s182, 8
      %s184 = scalar_lea.vmem %s0, %s183
      %s185 = smul.u32 8, %s19
      %p186 = scmp.lt.s32.totalorder %s18, 1
      %s187 = scalar_select %p186, %s18, 1
      %p188 = scmp.lt.s32.totalorder %s185, 15
      %s189 = scalar_select %p188, %s185, 15
      %s190 = smul.addr %s189, 8
      %s191 = smul.addr %s187, 128
      %s192 = sadd.s32 %s190, %s191
      %s193 = smul.addr %s192, 8
      %s194 = scalar_lea.vmem %s3, %s193
      %s195 = smul.u32 8, %s19
      %s196 = smul.u32 %s19, 8
      %s197 = smul.u32 %s196, 24
      %s198 = scalar_lea.vmem %s184, %s197
      %v199 = vld [vmem:[%s198] sm:$0xff]
      %v200 = vld [vmem:[%s198 + $0x8] sm:$0xff]
      %v201 = vld [vmem:[%s198 + $0x10] sm:$0x1]
      %v202 = vld [vmem:[%s198 + $0x18] sm:$0xff]
      %v203 = vld [vmem:[%s198 + $0x20] sm:$0xff]
      %v204 = vld [vmem:[%s198 + $0x28] sm:$0x1]
      %v205 = vld [vmem:[%s198 + $0x30] sm:$0xff]
      %v206 = vld [vmem:[%s198 + $0x38] sm:$0xff]
      %v207 = vld [vmem:[%s198 + $0x40] sm:$0x1]
      %v208 = vld [vmem:[%s198 + $0x48] sm:$0xff]
      %v209 = vld [vmem:[%s198 + $0x50] sm:$0xff]
      %v210 = vld [vmem:[%s198 + $0x58] sm:$0x1]
      %v211 = vld [vmem:[%s198 + $0x60] sm:$0xff]
      %v212 = vld [vmem:[%s198 + $0x68] sm:$0xff]
      %v213 = vld [vmem:[%s198 + $0x70] sm:$0x1]
      %v214 = vld [vmem:[%s198 + $0x78] sm:$0xff]
      %v215 = vld [vmem:[%s198 + $0x80] sm:$0xff]
      %v216 = vld [vmem:[%s198 + $0x88] sm:$0x1]
      %v217 = vld [vmem:[%s198 + $0x90] sm:$0xff]
      %v218 = vld [vmem:[%s198 + $0x98] sm:$0xff]
      %v219 = vld [vmem:[%s198 + $0xa0] sm:$0x1]
      %v220 = vld [vmem:[%s198 + $0xa8] sm:$0xff]
      %v221 = vld [vmem:[%s198 + $0xb0] sm:$0xff]
      %v222 = vld [vmem:[%s198 + $0xb8] sm:$0x1]
      %v223 = vld [vmem:[%s198 + $0xc0] sm:$0xff]
      %v224 = vld [vmem:[%s198 + $0xc8] sm:$0xff]
      %v225 = vld [vmem:[%s198 + $0xd0] sm:$0x1]
      %226 = vst [vmem:[#allocation2] sm:$0xff] %v199
      %227 = vst [vmem:[#allocation2 + $0x20] sm:$0xff] %v200
      %228 = vst [vmem:[#allocation2 + $0x40] sm:$0x1] %v201
      %229 = vst [vmem:[#allocation2 + $0x60] sm:$0xff] %v202
      %230 = vst [vmem:[#allocation2 + $0x80] sm:$0xff] %v203
      %231 = vst [vmem:[#allocation2 + $0xa0] sm:$0x1] %v204
      %232 = vst [vmem:[#allocation2 + $0xc0] sm:$0xff] %v205
      %233 = vst [vmem:[#allocation2 + $0xe0] sm:$0xff] %v206
      %234 = vst [vmem:[#allocation2 + $0x100] sm:$0x1] %v207
      %235 = vst [vmem:[#allocation2 + $0x120] sm:$0xff] %v208
      %236 = vst [vmem:[#allocation2 + $0x140] sm:$0xff] %v209
      %237 = vst [vmem:[#allocation2 + $0x160] sm:$0x1] %v210
      %238 = vst [vmem:[#allocation2 + $0x180] sm:$0xff] %v211
      %239 = vst [vmem:[#allocation2 + $0x1a0] sm:$0xff] %v212
      %240 = vst [vmem:[#allocation2 + $0x1c0] sm:$0x1] %v213
      %241 = vst [vmem:[#allocation2 + $0x1e0] sm:$0xff] %v214
      %242 = vst [vmem:[#allocation2 + $0x200] sm:$0xff] %v215
      %243 = vst [vmem:[#allocation2 + $0x220] sm:$0x1] %v216
      %244 = vst [vmem:[#allocation2 + $0x240] sm:$0xff] %v217
      %245 = vst [vmem:[#allocation2 + $0x260] sm:$0xff] %v218
      %246 = vst [vmem:[#allocation2 + $0x280] sm:$0x1] %v219
      %247 = vst [vmem:[#allocation2 + $0x2a0] sm:$0xff] %v220
      %248 = vst [vmem:[#allocation2 + $0x2c0] sm:$0xff] %v221
      %249 = vst [vmem:[#allocation2 + $0x2e0] sm:$0x1] %v222
      %250 = vst [vmem:[#allocation2 + $0x300] sm:$0xff] %v223
      %251 = vst [vmem:[#allocation2 + $0x320] sm:$0xff] %v224
      %252 = vst [vmem:[#allocation2 + $0x340] sm:$0x1] %v225
      %v253 = vld [vmem:[%s198 + $0x1] sm:$0xff]
      %v254 = vld [vmem:[%s198 + $0x9] sm:$0xff]
      %v255 = vld [vmem:[%s198 + $0x11] sm:$0x1]
      %v256 = vld [vmem:[%s198 + $0x19] sm:$0xff]
      %v257 = vld [vmem:[%s198 + $0x21] sm:$0xff]
      %v258 = vld [vmem:[%s198 + $0x29] sm:$0x1]
      %v259 = vld [vmem:[%s198 + $0x31] sm:$0xff]
      %v260 = vld [vmem:[%s198 + $0x39] sm:$0xff]
      %v261 = vld [vmem:[%s198 + $0x41] sm:$0x1]
      %v262 = vld [vmem:[%s198 + $0x49] sm:$0xff]
      %v263 = vld [vmem:[%s198 + $0x51] sm:$0xff]
      %v264 = vld [vmem:[%s198 + $0x59] sm:$0x1]
      %v265 = vld [vmem:[%s198 + $0x61] sm:$0xff]
      %v266 = vld [vmem:[%s198 + $0x69] sm:$0xff]
      %v267 = vld [vmem:[%s198 + $0x71] sm:$0x1]
      %v268 = vld [vmem:[%s198 + $0x79] sm:$0xff]
      %v269 = vld [vmem:[%s198 + $0x81] sm:$0xff]
      %v270 = vld [vmem:[%s198 + $0x89] sm:$0x1]
      %v271 = vld [vmem:[%s198 + $0x91] sm:$0xff]
      %v272 = vld [vmem:[%s198 + $0x99] sm:$0xff]
      %v273 = vld [vmem:[%s198 + $0xa1] sm:$0x1]
      %v274 = vld [vmem:[%s198 + $0xa9] sm:$0xff]
      %v275 = vld [vmem:[%s198 + $0xb1] sm:$0xff]
      %v276 = vld [vmem:[%s198 + $0xb9] sm:$0x1]
      %v277 = vld [vmem:[%s198 + $0xc1] sm:$0xff]
      %v278 = vld [vmem:[%s198 + $0xc9] sm:$0xff]
      %v279 = vld [vmem:[%s198 + $0xd1] sm:$0x1]
      %280 = vst [vmem:[#allocation2 + $0x8] sm:$0xff] %v253
      %281 = vst [vmem:[#allocation2 + $0x28] sm:$0xff] %v254
      %282 = vst [vmem:[#allocation2 + $0x48] sm:$0x1] %v255
      %283 = vst [vmem:[#allocation2 + $0x68] sm:$0xff] %v256
      %284 = vst [vmem:[#allocation2 + $0x88] sm:$0xff] %v257
      %285 = vst [vmem:[#allocation2 + $0xa8] sm:$0x1] %v258
      %286 = vst [vmem:[#allocation2 + $0xc8] sm:$0xff] %v259
      %287 = vst [vmem:[#allocation2 + $0xe8] sm:$0xff] %v260
      %288 = vst [vmem:[#allocation2 + $0x108] sm:$0x1] %v261
      %289 = vst [vmem:[#allocation2 + $0x128] sm:$0xff] %v262
      %290 = vst [vmem:[#allocation2 + $0x148] sm:$0xff] %v263
      %291 = vst [vmem:[#allocation2 + $0x168] sm:$0x1] %v264
      %292 = vst [vmem:[#allocation2 + $0x188] sm:$0xff] %v265
      %293 = vst [vmem:[#allocation2 + $0x1a8] sm:$0xff] %v266
      %294 = vst [vmem:[#allocation2 + $0x1c8] sm:$0x1] %v267
      %295 = vst [vmem:[#allocation2 + $0x1e8] sm:$0xff] %v268
      %296 = vst [vmem:[#allocation2 + $0x208] sm:$0xff] %v269
      %297 = vst [vmem:[#allocation2 + $0x228] sm:$0x1] %v270
      %298 = vst [vmem:[#allocation2 + $0x248] sm:$0xff] %v271
      %299 = vst [vmem:[#allocation2 + $0x268] sm:$0xff] %v272
      %300 = vst [vmem:[#allocation2 + $0x288] sm:$0x1] %v273
      %301 = vst [vmem:[#allocation2 + $0x2a8] sm:$0xff] %v274
      %302 = vst [vmem:[#allocation2 + $0x2c8] sm:$0xff] %v275
      %303 = vst [vmem:[#allocation2 + $0x2e8] sm:$0x1] %v276
      %304 = vst [vmem:[#allocation2 + $0x308] sm:$0xff] %v277
      %305 = vst [vmem:[#allocation2 + $0x328] sm:$0xff] %v278
      %306 = vst [vmem:[#allocation2 + $0x348] sm:$0x1] %v279
      %s307 = sadd.s32 %s196, 1
      %s308 = smul.u32 %s307, 24
      %s309 = scalar_lea.vmem %s184, %s308
      %v310 = vld [vmem:[%s309] sm:$0xff]
      %v311 = vld [vmem:[%s309 + $0x8] sm:$0xff]
      %v312 = vld [vmem:[%s309 + $0x10] sm:$0x1]
      %v313 = vld [vmem:[%s309 + $0x18] sm:$0xff]
      %v314 = vld [vmem:[%s309 + $0x20] sm:$0xff]
      %v315 = vld [vmem:[%s309 + $0x28] sm:$0x1]
      %v316 = vld [vmem:[%s309 + $0x30] sm:$0xff]
      %v317 = vld [vmem:[%s309 + $0x38] sm:$0xff]
      %v318 = vld [vmem:[%s309 + $0x40] sm:$0x1]
      %v319 = vld [vmem:[%s309 + $0x48] sm:$0xff]
      %v320 = vld [vmem:[%s309 + $0x50] sm:$0xff]
      %v321 = vld [vmem:[%s309 + $0x58] sm:$0x1]
      %v322 = vld [vmem:[%s309 + $0x60] sm:$0xff]
      %v323 = vld [vmem:[%s309 + $0x68] sm:$0xff]
      %v324 = vld [vmem:[%s309 + $0x70] sm:$0x1]
      %v325 = vld [vmem:[%s309 + $0x78] sm:$0xff]
      %v326 = vld [vmem:[%s309 + $0x80] sm:$0xff]
      %v327 = vld [vmem:[%s309 + $0x88] sm:$0x1]
      %v328 = vld [vmem:[%s309 + $0x90] sm:$0xff]
      %v329 = vld [vmem:[%s309 + $0x98] sm:$0xff]
      %v330 = vld [vmem:[%s309 + $0xa0] sm:$0x1]
      %v331 = vld [vmem:[%s309 + $0xa8] sm:$0xff]
      %v332 = vld [vmem:[%s309 + $0xb0] sm:$0xff]
      %v333 = vld [vmem:[%s309 + $0xb8] sm:$0x1]
      %v334 = vld [vmem:[%s309 + $0xc0] sm:$0xff]
      %v335 = vld [vmem:[%s309 + $0xc8] sm:$0xff]
      %v336 = vld [vmem:[%s309 + $0xd0] sm:$0x1]
      %337 = vst [vmem:[#allocation2 + $0x10] sm:$0xff] %v310
      %338 = vst [vmem:[#allocation2 + $0x30] sm:$0xff] %v311
      %339 = vst [vmem:[#allocation2 + $0x50] sm:$0x1] %v312
      %340 = vst [vmem:[#allocation2 + $0x70] sm:$0xff] %v313
      %341 = vst [vmem:[#allocation2 + $0x90] sm:$0xff] %v314
      %342 = vst [vmem:[#allocation2 + $0xb0] sm:$0x1] %v315
      %343 = vst [vmem:[#allocation2 + $0xd0] sm:$0xff] %v316
      %344 = vst [vmem:[#allocation2 + $0xf0] sm:$0xff] %v317
      %345 = vst [vmem:[#allocation2 + $0x110] sm:$0x1] %v318
      %346 = vst [vmem:[#allocation2 + $0x130] sm:$0xff] %v319
      %347 = vst [vmem:[#allocation2 + $0x150] sm:$0xff] %v320
      %348 = vst [vmem:[#allocation2 + $0x170] sm:$0x1] %v321
      %349 = vst [vmem:[#allocation2 + $0x190] sm:$0xff] %v322
      %350 = vst [vmem:[#allocation2 + $0x1b0] sm:$0xff] %v323
      %351 = vst [vmem:[#allocation2 + $0x1d0] sm:$0x1] %v324
      %352 = vst [vmem:[#allocation2 + $0x1f0] sm:$0xff] %v325
      %353 = vst [vmem:[#allocation2 + $0x210] sm:$0xff] %v326
      %354 = vst [vmem:[#allocation2 + $0x230] sm:$0x1] %v327
      %355 = vst [vmem:[#allocation2 + $0x250] sm:$0xff] %v328
      %356 = vst [vmem:[#allocation2 + $0x270] sm:$0xff] %v329
      %357 = vst [vmem:[#allocation2 + $0x290] sm:$0x1] %v330
      %358 = vst [vmem:[#allocation2 + $0x2b0] sm:$0xff] %v331
      %359 = vst [vmem:[#allocation2 + $0x2d0] sm:$0xff] %v332
      %360 = vst [vmem:[#allocation2 + $0x2f0] sm:$0x1] %v333
      %361 = vst [vmem:[#allocation2 + $0x310] sm:$0xff] %v334
      %362 = vst [vmem:[#allocation2 + $0x330] sm:$0xff] %v335
      %363 = vst [vmem:[#allocation2 + $0x350] sm:$0x1] %v336
      %v364 = vld [vmem:[%s309 + $0x1] sm:$0xff]
      %v365 = vld [vmem:[%s309 + $0x9] sm:$0xff]
      %v366 = vld [vmem:[%s309 + $0x11] sm:$0x1]
      %v367 = vld [vmem:[%s309 + $0x19] sm:$0xff]
      %v368 = vld [vmem:[%s309 + $0x21] sm:$0xff]
      %v369 = vld [vmem:[%s309 + $0x29] sm:$0x1]
      %v370 = vld [vmem:[%s309 + $0x31] sm:$0xff]
      %v371 = vld [vmem:[%s309 + $0x39] sm:$0xff]
      %v372 = vld [vmem:[%s309 + $0x41] sm:$0x1]
      %v373 = vld [vmem:[%s309 + $0x49] sm:$0xff]
      %v374 = vld [vmem:[%s309 + $0x51] sm:$0xff]
      %v375 = vld [vmem:[%s309 + $0x59] sm:$0x1]
      %v376 = vld [vmem:[%s309 + $0x61] sm:$0xff]
      %v377 = vld [vmem:[%s309 + $0x69] sm:$0xff]
      %v378 = vld [vmem:[%s309 + $0x71] sm:$0x1]
      %v379 = vld [vmem:[%s309 + $0x79] sm:$0xff]
      %v380 = vld [vmem:[%s309 + $0x81] sm:$0xff]
      %v381 = vld [vmem:[%s309 + $0x89] sm:$0x1]
      %v382 = vld [vmem:[%s309 + $0x91] sm:$0xff]
      %v383 = vld [vmem:[%s309 + $0x99] sm:$0xff]
      %v384 = vld [vmem:[%s309 + $0xa1] sm:$0x1]
      %v385 = vld [vmem:[%s309 + $0xa9] sm:$0xff]
      %v386 = vld [vmem:[%s309 + $0xb1] sm:$0xff]
      %v387 = vld [vmem:[%s309 + $0xb9] sm:$0x1]
      %v388 = vld [vmem:[%s309 + $0xc1] sm:$0xff]
      %v389 = vld [vmem:[%s309 + $0xc9] sm:$0xff]
      %v390 = vld [vmem:[%s309 + $0xd1] sm:$0x1]
      %391 = vst [vmem:[#allocation2 + $0x18] sm:$0xff] %v364
      %392 = vst [vmem:[#allocation2 + $0x38] sm:$0xff] %v365
      %393 = vst [vmem:[#allocation2 + $0x58] sm:$0x1] %v366
      %394 = vst [vmem:[#allocation2 + $0x78] sm:$0xff] %v367
      %395 = vst [vmem:[#allocation2 + $0x98] sm:$0xff] %v368
      %396 = vst [vmem:[#allocation2 + $0xb8] sm:$0x1] %v369
      %397 = vst [vmem:[#allocation2 + $0xd8] sm:$0xff] %v370
      %398 = vst [vmem:[#allocation2 + $0xf8] sm:$0xff] %v371
      %399 = vst [vmem:[#allocation2 + $0x118] sm:$0x1] %v372
      %400 = vst [vmem:[#allocation2 + $0x138] sm:$0xff] %v373
      %401 = vst [vmem:[#allocation2 + $0x158] sm:$0xff] %v374
      %402 = vst [vmem:[#allocation2 + $0x178] sm:$0x1] %v375
      %403 = vst [vmem:[#allocation2 + $0x198] sm:$0xff] %v376
      %404 = vst [vmem:[#allocation2 + $0x1b8] sm:$0xff] %v377
      %405 = vst [vmem:[#allocation2 + $0x1d8] sm:$0x1] %v378
      %406 = vst [vmem:[#allocation2 + $0x1f8] sm:$0xff] %v379
      %407 = vst [vmem:[#allocation2 + $0x218] sm:$0xff] %v380
      %408 = vst [vmem:[#allocation2 + $0x238] sm:$0x1] %v381
      %409 = vst [vmem:[#allocation2 + $0x258] sm:$0xff] %v382
      %410 = vst [vmem:[#allocation2 + $0x278] sm:$0xff] %v383
      %411 = vst [vmem:[#allocation2 + $0x298] sm:$0x1] %v384
      %412 = vst [vmem:[#allocation2 + $0x2b8] sm:$0xff] %v385
      %413 = vst [vmem:[#allocation2 + $0x2d8] sm:$0xff] %v386
      %414 = vst [vmem:[#allocation2 + $0x2f8] sm:$0x1] %v387
      %415 = vst [vmem:[#allocation2 + $0x318] sm:$0xff] %v388
      %416 = vst [vmem:[#allocation2 + $0x338] sm:$0xff] %v389
      %417 = vst [vmem:[#allocation2 + $0x358] sm:$0x1] %v390
      %v418 = vld [vmem:[%s2] sm:$0x1]
      %v419 = vld [vmem:[#allocation2] sm:$0xff]
      %v420 = vld [vmem:[#allocation2 + $0x8] sm:$0xff]
      %v421 = vld [vmem:[#allocation2 + $0x10] sm:$0xff]
      %v422 = vld [vmem:[#allocation2 + $0x18] sm:$0xff]
      %v423 = vld [vmem:[#allocation2 + $0x20] sm:$0xff]
      %v424 = vld [vmem:[#allocation2 + $0x28] sm:$0xff]
      %v425 = vld [vmem:[#allocation2 + $0x30] sm:$0xff]
      %v426 = vld [vmem:[#allocation2 + $0x38] sm:$0xff]
      %v427 = vld [vmem:[#allocation2 + $0x60] sm:$0xff]
      %v428 = vld [vmem:[#allocation2 + $0x68] sm:$0xff]
      %v429 = vld [vmem:[#allocation2 + $0x70] sm:$0xff]
      %v430 = vld [vmem:[#allocation2 + $0x78] sm:$0xff]
      %v431 = vld [vmem:[#allocation2 + $0x80] sm:$0xff]
      %v432 = vld [vmem:[#allocation2 + $0x88] sm:$0xff]
      %v433 = vld [vmem:[#allocation2 + $0x90] sm:$0xff]
      %v434 = vld [vmem:[#allocation2 + $0x98] sm:$0xff]
      %v435 = vld [vmem:[#allocation2 + $0xc0] sm:$0xff]
      %v436 = vld [vmem:[#allocation2 + $0xc8] sm:$0xff]
      %v437 = vld [vmem:[#allocation2 + $0xd0] sm:$0xff]
      %v438 = vld [vmem:[#allocation2 + $0xd8] sm:$0xff]
      %v439 = vld [vmem:[#allocation2 + $0xe0] sm:$0xff]
      %v440 = vld [vmem:[#allocation2 + $0xe8] sm:$0xff]
      %v441 = vld [vmem:[#allocation2 + $0xf0] sm:$0xff]
      %v442 = vld [vmem:[#allocation2 + $0xf8] sm:$0xff]
      %v443 = vld [vmem:[#allocation2 + $0x120] sm:$0xff]
      %v444 = vld [vmem:[#allocation2 + $0x128] sm:$0xff]
      %v445 = vld [vmem:[#allocation2 + $0x130] sm:$0xff]
      %v446 = vld [vmem:[#allocation2 + $0x138] sm:$0xff]
      %v447 = vld [vmem:[#allocation2 + $0x140] sm:$0xff]
      %v448 = vld [vmem:[#allocation2 + $0x148] sm:$0xff]
      %v449 = vld [vmem:[#allocation2 + $0x150] sm:$0xff]
      %v450 = vld [vmem:[#allocation2 + $0x158] sm:$0xff]
      %v451 = vld [vmem:[#allocation2 + $0x180] sm:$0xff]
      %v452 = vld [vmem:[#allocation2 + $0x188] sm:$0xff]
      %v453 = vld [vmem:[#allocation2 + $0x190] sm:$0xff]
      %v454 = vld [vmem:[#allocation2 + $0x198] sm:$0xff]
      %v455 = vld [vmem:[#allocation2 + $0x1a0] sm:$0xff]
      %v456 = vld [vmem:[#allocation2 + $0x1a8] sm:$0xff]
      %v457 = vld [vmem:[#allocation2 + $0x1b0] sm:$0xff]
      %v458 = vld [vmem:[#allocation2 + $0x1b8] sm:$0xff]
      %v459 = vld [vmem:[#allocation2 + $0x1e0] sm:$0xff]
      %v460 = vld [vmem:[#allocation2 + $0x1e8] sm:$0xff]
      %v461 = vld [vmem:[#allocation2 + $0x1f0] sm:$0xff]
      %v462 = vld [vmem:[#allocation2 + $0x1f8] sm:$0xff]
      %v463 = vld [vmem:[#allocation2 + $0x200] sm:$0xff]
      %v464 = vld [vmem:[#allocation2 + $0x208] sm:$0xff]
      %v465 = vld [vmem:[#allocation2 + $0x210] sm:$0xff]
      %v466 = vld [vmem:[#allocation2 + $0x218] sm:$0xff]
      %v467 = vld [vmem:[#allocation2 + $0x240] sm:$0xff]
      %v468 = vld [vmem:[#allocation2 + $0x248] sm:$0xff]
      %v469 = vld [vmem:[#allocation2 + $0x250] sm:$0xff]
      %v470 = vld [vmem:[#allocation2 + $0x258] sm:$0xff]
      %v471 = vld [vmem:[#allocation2 + $0x260] sm:$0xff]
      %v472 = vld [vmem:[#allocation2 + $0x268] sm:$0xff]
      %v473 = vld [vmem:[#allocation2 + $0x270] sm:$0xff]
      %v474 = vld [vmem:[#allocation2 + $0x278] sm:$0xff]
      %v475 = vld [vmem:[#allocation2 + $0x2a0] sm:$0xff]
      %v476 = vld [vmem:[#allocation2 + $0x2a8] sm:$0xff]
      %v477 = vld [vmem:[#allocation2 + $0x2b0] sm:$0xff]
      %v478 = vld [vmem:[#allocation2 + $0x2b8] sm:$0xff]
      %v479 = vld [vmem:[#allocation2 + $0x2c0] sm:$0xff]
      %v480 = vld [vmem:[#allocation2 + $0x2c8] sm:$0xff]
      %v481 = vld [vmem:[#allocation2 + $0x2d0] sm:$0xff]
      %v482 = vld [vmem:[#allocation2 + $0x2d8] sm:$0xff]
      %v483 = vld [vmem:[%s1] sm:$0xff]
      %v484 = vld [vmem:[%s1 + $0x8] sm:$0xff]
      %v485 = vld [vmem:[%s1 + $0x10] sm:$0xff]
      %v486 = vld [vmem:[%s1 + $0x18] sm:$0xff]
      %v487 = vld [vmem:[%s1 + $0x20] sm:$0xff]
      %v488 = vld [vmem:[%s1 + $0x28] sm:$0xff]
      %v489 = vld [vmem:[%s1 + $0x30] sm:$0xff]
      %v490 = vld [vmem:[%s1 + $0x38] sm:$0xff]
      %v491 = vld [vmem:[%s1 + $0x40] sm:$0xff]
      %v492 = vld [vmem:[%s1 + $0x48] sm:$0xff]
      %v493 = vld [vmem:[%s1 + $0x50] sm:$0xff]
      %v494 = vld [vmem:[%s1 + $0x58] sm:$0xff]
      %v495 = vld [vmem:[%s1 + $0x60] sm:$0xff]
      %v496 = vld [vmem:[%s1 + $0x68] sm:$0xff]
      %v497 = vld [vmem:[%s1 + $0x70] sm:$0xff]
      %v498 = vld [vmem:[%s1 + $0x78] sm:$0xff]
      %v499 = vld [vmem:[%s1 + $0x80] sm:$0xff]
      %v500 = vld [vmem:[%s1 + $0x88] sm:$0xff]
      %v501 = vld [vmem:[%s1 + $0x90] sm:$0xff]
      %v502 = vld [vmem:[%s1 + $0x98] sm:$0xff]
      %v503 = vld [vmem:[%s1 + $0xa0] sm:$0xff]
      %v504 = vld [vmem:[%s1 + $0xa8] sm:$0xff]
      %v505 = vld [vmem:[%s1 + $0xb0] sm:$0xff]
      %v506 = vld [vmem:[%s1 + $0xb8] sm:$0xff]
      %v507 = vld [vmem:[%s1 + $0xc0] sm:$0xff]
      %v508 = vld [vmem:[%s1 + $0xc8] sm:$0xff]
      %v509 = vld [vmem:[%s1 + $0xd0] sm:$0xff]
      %v510 = vld [vmem:[%s1 + $0xd8] sm:$0xff]
      %v511 = vld [vmem:[%s1 + $0xe0] sm:$0xff]
      %v512 = vld [vmem:[%s1 + $0xe8] sm:$0xff]
      %v513 = vld [vmem:[%s1 + $0xf0] sm:$0xff]
      %v514 = vld [vmem:[%s1 + $0xf8] sm:$0xff]
      %v515 = vld [vmem:[%s1 + $0x100] sm:$0xff]
      %v516 = vld [vmem:[%s1 + $0x108] sm:$0xff]
      %v517 = vld [vmem:[%s1 + $0x110] sm:$0xff]
      %v518 = vld [vmem:[%s1 + $0x118] sm:$0xff]
      %v519 = vld [vmem:[%s1 + $0x120] sm:$0xff]
      %v520 = vld [vmem:[%s1 + $0x128] sm:$0xff]
      %v521 = vld [vmem:[%s1 + $0x130] sm:$0xff]
      %v522 = vld [vmem:[%s1 + $0x138] sm:$0xff]
      %v523 = vld [vmem:[%s1 + $0x140] sm:$0xff]
      %v524 = vld [vmem:[%s1 + $0x148] sm:$0xff]
      %v525 = vld [vmem:[%s1 + $0x150] sm:$0xff]
      %v526 = vld [vmem:[%s1 + $0x158] sm:$0xff]
      %v527 = vld [vmem:[%s1 + $0x160] sm:$0xff]
      %v528 = vld [vmem:[%s1 + $0x168] sm:$0xff]
      %v529 = vld [vmem:[%s1 + $0x170] sm:$0xff]
      %v530 = vld [vmem:[%s1 + $0x178] sm:$0xff]
      %v531 = vld [vmem:[%s1 + $0x180] sm:$0xff]
      %v532 = vld [vmem:[%s1 + $0x188] sm:$0xff]
      %v533 = vld [vmem:[%s1 + $0x190] sm:$0xff]
      %v534 = vld [vmem:[%s1 + $0x198] sm:$0xff]
      %v535 = vld [vmem:[%s1 + $0x1a0] sm:$0xff]
      %v536 = vld [vmem:[%s1 + $0x1a8] sm:$0xff]
      %v537 = vld [vmem:[%s1 + $0x1b0] sm:$0xff]
      %v538 = vld [vmem:[%s1 + $0x1b8] sm:$0xff]
      %v539 = vld [vmem:[%s1 + $0x1c0] sm:$0xff]
      %v540 = vld [vmem:[%s1 + $0x1c8] sm:$0xff]
      %v541 = vld [vmem:[%s1 + $0x1d0] sm:$0xff]
      %v542 = vld [vmem:[%s1 + $0x1d8] sm:$0xff]
      %v543 = vld [vmem:[%s1 + $0x1e0] sm:$0xff]
      %v544 = vld [vmem:[%s1 + $0x1e8] sm:$0xff]
      %v545 = vld [vmem:[%s1 + $0x1f0] sm:$0xff]
      %v546 = vld [vmem:[%s1 + $0x1f8] sm:$0xff]
      %v548 = vlaneseq
      %v549 = vshrl.u32 %v548, 7
      %v550 = vsub.s32 0, %v549
      %v551 = vrot.slane %v418, %v550
      %553 = vmatprep.subr.mxu0 0.0
      %554 = vmatpush1.msra.mxu0 %v498
      %555 = vmatprep.subr.mxu0 0.0
      %556 = vmatpush1.msra.mxu0 %v497
      %557 = vmatprep.subr.mxu0 0.0
      %558 = vmatpush1.msra.mxu0 %v496
      %559 = vmatprep.subr.mxu0 0.0
      %560 = vmatpush1.msra.mxu0 %v495
      %561 = vmatprep.subr.mxu0 0.0
      %562 = vmatpush1.msra.mxu0 %v494
      %563 = vmatprep.subr.mxu0 0.0
      %564 = vmatpush1.msra.mxu0 %v493
      %565 = vmatprep.subr.mxu0 0.0
      %566 = vmatpush1.msra.mxu0 %v492
      %567 = vmatprep.subr.mxu0 0.0
      %568 = vmatpush1.msra.mxu0 %v491
      %569 = vmatprep.subr.mxu0 0.0
      %570 = vmatpush1.msra.mxu0 %v490
      %571 = vmatprep.subr.mxu0 0.0
      %572 = vmatpush1.msra.mxu0 %v489
      %573 = vmatprep.subr.mxu0 0.0
      %574 = vmatpush1.msra.mxu0 %v488
      %575 = vmatprep.subr.mxu0 0.0
      %576 = vmatpush1.msra.mxu0 %v487
      %577 = vmatprep.subr.mxu0 0.0
      %578 = vmatpush1.msra.mxu0 %v486
      %579 = vmatprep.subr.mxu0 0.0
      %580 = vmatpush1.msra.mxu0 %v485
      %581 = vmatprep.subr.mxu0 0.0
      %582 = vmatpush1.msra.mxu0 %v484
      %583 = vmatprep.subr.mxu0 0.0
      %584 = vmatpush1.msra.mxu0 %v483
      %585 = vmatprep.subr.mxu0 0.0
      %586 = vmatpush2.msra.mxu0 %v514
      %587 = vmatprep.subr.mxu0 0.0
      %588 = vmatpush2.msra.mxu0 %v513
      %589 = vmatprep.subr.mxu0 0.0
      %590 = vmatpush2.msra.mxu0 %v512
      %591 = vmatprep.subr.mxu0 0.0
      %592 = vmatpush2.msra.mxu0 %v511
      %593 = vmatprep.subr.mxu0 0.0
      %594 = vmatpush2.msra.mxu0 %v510
      %595 = vmatprep.subr.mxu0 0.0
      %596 = vmatpush2.msra.mxu0 %v509
      %597 = vmatprep.subr.mxu0 0.0
      %598 = vmatpush2.msra.mxu0 %v508
      %599 = vmatprep.subr.mxu0 0.0
      %600 = vmatpush2.msra.mxu0 %v507
      %601 = vmatprep.subr.mxu0 0.0
      %602 = vmatpush2.msra.mxu0 %v506
      %603 = vmatprep.subr.mxu0 0.0
      %604 = vmatpush2.msra.mxu0 %v505
      %605 = vmatprep.subr.mxu0 0.0
      %606 = vmatpush2.msra.mxu0 %v504
      %607 = vmatprep.subr.mxu0 0.0
      %608 = vmatpush2.msra.mxu0 %v503
      %609 = vmatprep.subr.mxu0 0.0
      %610 = vmatpush2.msra.mxu0 %v502
      %611 = vmatprep.subr.mxu0 0.0
      %612 = vmatpush2.msra.mxu0 %v501
      %613 = vmatprep.subr.mxu0 0.0
      %614 = vmatpush2.msra.mxu0 %v500
      %615 = vmatprep.subr.mxu0 0.0
      %616 = vmatpush2.msra.mxu0 %v499
      %617 = vmatprep.mubr.f32.mxu0 %v420
      %618 = vmatmul.mubr.f32.gmra.mxu0 %v419
      %v619 = vpop.f32.mrf.mxu0
      %v620 = vadd.f32 %v551, %v619
      %v621 = vpop.f32.mrf.mxu0
      %622 = vmatprep.mubr.f32.mxu0 %v424
      %623 = vmatmul.mubr.f32.gmra.mxu0 %v423
      %v624 = vpop.f32.mrf.mxu0
      %v625 = vadd.f32 %v551, %v624
      %v626 = vpop.f32.mrf.mxu0
      %627 = vmatprep.mubr.f32.mxu0 %v428
      %628 = vmatmul.mubr.f32.gmra.mxu0 %v427
      %v629 = vpop.f32.mrf.mxu0
      %v630 = vadd.f32 %v551, %v629
      %v631 = vpop.f32.mrf.mxu0
      %632 = vmatprep.mubr.f32.mxu0 %v432
      %633 = vmatmul.mubr.f32.gmra.mxu0 %v431
      %v634 = vpop.f32.mrf.mxu0
      %v635 = vadd.f32 %v551, %v634
      %v636 = vpop.f32.mrf.mxu0
      %637 = vmatprep.mubr.f32.mxu0 %v436
      %638 = vmatmul.mubr.f32.gmra.mxu0 %v435
      %v639 = vpop.f32.mrf.mxu0
      %v640 = vadd.f32 %v551, %v639
      %v641 = vpop.f32.mrf.mxu0
      %642 = vmatprep.mubr.f32.mxu0 %v440
      %643 = vmatmul.mubr.f32.gmra.mxu0 %v439
      %v644 = vpop.f32.mrf.mxu0
      %v645 = vadd.f32 %v551, %v644
      %v646 = vpop.f32.mrf.mxu0
      %647 = vmatprep.mubr.f32.mxu0 %v444
      %648 = vmatmul.mubr.f32.gmra.mxu0 %v443
      %v649 = vpop.f32.mrf.mxu0
      %v650 = vadd.f32 %v551, %v649
      %v651 = vpop.f32.mrf.mxu0
      %652 = vmatprep.mubr.f32.mxu0 %v448
      %653 = vmatmul.mubr.f32.gmra.mxu0 %v447
      %v654 = vpop.f32.mrf.mxu0
      %v655 = vadd.f32 %v551, %v654
      %v656 = vpop.f32.mrf.mxu0
      %657 = vmatprep.mubr.f32.mxu0 %v452
      %658 = vmatmul.mubr.f32.gmra.mxu0 %v451
      %v659 = vpop.f32.mrf.mxu0
      %v660 = vadd.f32 %v551, %v659
      %v661 = vpop.f32.mrf.mxu0
      %662 = vmatprep.mubr.f32.mxu0 %v456
      %663 = vmatmul.mubr.f32.gmra.mxu0 %v455
      %v664 = vpop.f32.mrf.mxu0
      %v665 = vadd.f32 %v551, %v664
      %v666 = vpop.f32.mrf.mxu0
      %667 = vmatprep.mubr.f32.mxu0 %v460
      %668 = vmatmul.mubr.f32.gmra.mxu0 %v459
      %v669 = vpop.f32.mrf.mxu0
      %v670 = vadd.f32 %v551, %v669
      %v671 = vpop.f32.mrf.mxu0
      %672 = vmatprep.mubr.f32.mxu0 %v464
      %673 = vmatmul.mubr.f32.gmra.mxu0 %v463
      %v674 = vpop.f32.mrf.mxu0
      %v675 = vadd.f32 %v551, %v674
      %v676 = vpop.f32.mrf.mxu0
      %677 = vmatprep.mubr.f32.mxu0 %v468
      %678 = vmatmul.mubr.f32.gmra.mxu0 %v467
      %v679 = vpop.f32.mrf.mxu0
      %v680 = vadd.f32 %v551, %v679
      %v681 = vpop.f32.mrf.mxu0
      %682 = vmatprep.mubr.f32.mxu0 %v472
      %683 = vmatmul.mubr.f32.gmra.mxu0 %v471
      %v684 = vpop.f32.mrf.mxu0
      %v685 = vadd.f32 %v551, %v684
      %v686 = vpop.f32.mrf.mxu0
      %687 = vmatprep.mubr.f32.mxu0 %v476
      %688 = vmatmul.mubr.f32.gmra.mxu0 %v475
      %v689 = vpop.f32.mrf.mxu0
      %v690 = vadd.f32 %v551, %v689
      %v691 = vpop.f32.mrf.mxu0
      %692 = vmatprep.mubr.f32.mxu0 %v480
      %693 = vmatmul.mubr.f32.gmra.mxu0 %v479
      %v694 = vpop.f32.mrf.mxu0
      %v695 = vadd.f32 %v551, %v694
      %v696 = vpop.f32.mrf.mxu0
      %697 = vdwg.mxu0
      %698 = vmatprep.subr.mxu0 0.0
      %699 = vmatpush1.msra.mxu0 %v530
      %700 = vmatprep.subr.mxu0 0.0
      %701 = vmatpush1.msra.mxu0 %v529
      %702 = vmatprep.subr.mxu0 0.0
      %703 = vmatpush1.msra.mxu0 %v528
      %704 = vmatprep.subr.mxu0 0.0
      %705 = vmatpush1.msra.mxu0 %v527
      %706 = vmatprep.subr.mxu0 0.0
      %707 = vmatpush1.msra.mxu0 %v526
      %708 = vmatprep.subr.mxu0 0.0
      %709 = vmatpush1.msra.mxu0 %v525
      %710 = vmatprep.subr.mxu0 0.0
      %711 = vmatpush1.msra.mxu0 %v524
      %712 = vmatprep.subr.mxu0 0.0
      %713 = vmatpush1.msra.mxu0 %v523
      %714 = vmatprep.subr.mxu0 0.0
      %715 = vmatpush1.msra.mxu0 %v522
      %716 = vmatprep.subr.mxu0 0.0
      %717 = vmatpush1.msra.mxu0 %v521
      %718 = vmatprep.subr.mxu0 0.0
      %719 = vmatpush1.msra.mxu0 %v520
      %720 = vmatprep.subr.mxu0 0.0
      %721 = vmatpush1.msra.mxu0 %v519
      %722 = vmatprep.subr.mxu0 0.0
      %723 = vmatpush1.msra.mxu0 %v518
      %724 = vmatprep.subr.mxu0 0.0
      %725 = vmatpush1.msra.mxu0 %v517
      %726 = vmatprep.subr.mxu0 0.0
      %727 = vmatpush1.msra.mxu0 %v516
      %728 = vmatprep.subr.mxu0 0.0
      %729 = vmatpush1.msra.mxu0 %v515
      %730 = vmatprep.subr.mxu0 0.0
      %731 = vmatpush2.msra.mxu0 %v546
      %732 = vmatprep.subr.mxu0 0.0
      %733 = vmatpush2.msra.mxu0 %v545
      %734 = vmatprep.subr.mxu0 0.0
      %735 = vmatpush2.msra.mxu0 %v544
      %736 = vmatprep.subr.mxu0 0.0
      %737 = vmatpush2.msra.mxu0 %v543
      %738 = vmatprep.subr.mxu0 0.0
      %739 = vmatpush2.msra.mxu0 %v542
      %740 = vmatprep.subr.mxu0 0.0
      %741 = vmatpush2.msra.mxu0 %v541
      %742 = vmatprep.subr.mxu0 0.0
      %743 = vmatpush2.msra.mxu0 %v540
      %744 = vmatprep.subr.mxu0 0.0
      %745 = vmatpush2.msra.mxu0 %v539
      %746 = vmatprep.subr.mxu0 0.0
      %747 = vmatpush2.msra.mxu0 %v538
      %748 = vmatprep.subr.mxu0 0.0
      %749 = vmatpush2.msra.mxu0 %v537
      %750 = vmatprep.subr.mxu0 0.0
      %751 = vmatpush2.msra.mxu0 %v536
      %752 = vmatprep.subr.mxu0 0.0
      %753 = vmatpush2.msra.mxu0 %v535
      %754 = vmatprep.subr.mxu0 0.0
      %755 = vmatpush2.msra.mxu0 %v534
      %756 = vmatprep.subr.mxu0 0.0
      %757 = vmatpush2.msra.mxu0 %v533
      %758 = vmatprep.subr.mxu0 0.0
      %759 = vmatpush2.msra.mxu0 %v532
      %760 = vmatprep.subr.mxu0 0.0
      %761 = vmatpush2.msra.mxu0 %v531
      %762 = vmatprep.mubr.f32.mxu0 %v422
      %763 = vmatmul.mubr.f32.gmra.mxu0 %v421
      %v764 = vpop.f32.mrf.mxu0
      %v765 = vadd.f32 %v620, %v764
      %v766 = vpop.f32.mrf.mxu0
      %767 = vmatprep.mubr.f32.mxu0 %v426
      %768 = vmatmul.mubr.f32.gmra.mxu0 %v425
      %v769 = vpop.f32.mrf.mxu0
      %v770 = vadd.f32 %v625, %v769
      %v771 = vpop.f32.mrf.mxu0
      %772 = vmatprep.mubr.f32.mxu0 %v430
      %773 = vmatmul.mubr.f32.gmra.mxu0 %v429
      %v774 = vpop.f32.mrf.mxu0
      %v775 = vadd.f32 %v630, %v774
      %v776 = vpop.f32.mrf.mxu0
      %777 = vmatprep.mubr.f32.mxu0 %v434
      %778 = vmatmul.mubr.f32.gmra.mxu0 %v433
      %v779 = vpop.f32.mrf.mxu0
      %v780 = vadd.f32 %v635, %v779
      %v781 = vpop.f32.mrf.mxu0
      %782 = vmatprep.mubr.f32.mxu0 %v438
      %783 = vmatmul.mubr.f32.gmra.mxu0 %v437
      %v784 = vpop.f32.mrf.mxu0
      %v785 = vadd.f32 %v640, %v784
      %v786 = vpop.f32.mrf.mxu0
      %787 = vmatprep.mubr.f32.mxu0 %v442
      %788 = vmatmul.mubr.f32.gmra.mxu0 %v441
      %v789 = vpop.f32.mrf.mxu0
      %v790 = vadd.f32 %v645, %v789
      %v791 = vpop.f32.mrf.mxu0
      %792 = vmatprep.mubr.f32.mxu0 %v446
      %793 = vmatmul.mubr.f32.gmra.mxu0 %v445
      %v794 = vpop.f32.mrf.mxu0
      %v795 = vadd.f32 %v650, %v794
      %v796 = vpop.f32.mrf.mxu0
      %797 = vmatprep.mubr.f32.mxu0 %v450
      %798 = vmatmul.mubr.f32.gmra.mxu0 %v449
      %v799 = vpop.f32.mrf.mxu0
      %v800 = vadd.f32 %v655, %v799
      %v801 = vpop.f32.mrf.mxu0
      %802 = vmatprep.mubr.f32.mxu0 %v454
      %803 = vmatmul.mubr.f32.gmra.mxu0 %v453
      %v804 = vpop.f32.mrf.mxu0
      %v805 = vadd.f32 %v660, %v804
      %v806 = vpop.f32.mrf.mxu0
      %807 = vmatprep.mubr.f32.mxu0 %v458
      %808 = vmatmul.mubr.f32.gmra.mxu0 %v457
      %v809 = vpop.f32.mrf.mxu0
      %v810 = vadd.f32 %v665, %v809
      %v811 = vpop.f32.mrf.mxu0
      %812 = vmatprep.mubr.f32.mxu0 %v462
      %813 = vmatmul.mubr.f32.gmra.mxu0 %v461
      %v814 = vpop.f32.mrf.mxu0
      %v815 = vadd.f32 %v670, %v814
      %v816 = vpop.f32.mrf.mxu0
      %817 = vmatprep.mubr.f32.mxu0 %v466
      %818 = vmatmul.mubr.f32.gmra.mxu0 %v465
      %v819 = vpop.f32.mrf.mxu0
      %v820 = vadd.f32 %v675, %v819
      %v821 = vpop.f32.mrf.mxu0
      %822 = vmatprep.mubr.f32.mxu0 %v470
      %823 = vmatmul.mubr.f32.gmra.mxu0 %v469
      %v824 = vpop.f32.mrf.mxu0
      %v825 = vadd.f32 %v680, %v824
      %v826 = vpop.f32.mrf.mxu0
      %827 = vmatprep.mubr.f32.mxu0 %v474
      %828 = vmatmul.mubr.f32.gmra.mxu0 %v473
      %v829 = vpop.f32.mrf.mxu0
      %v830 = vadd.f32 %v685, %v829
      %v831 = vpop.f32.mrf.mxu0
      %832 = vmatprep.mubr.f32.mxu0 %v478
      %833 = vmatmul.mubr.f32.gmra.mxu0 %v477
      %v834 = vpop.f32.mrf.mxu0
      %v835 = vadd.f32 %v690, %v834
      %v836 = vpop.f32.mrf.mxu0
      %837 = vmatprep.mubr.f32.mxu0 %v482
      %838 = vmatmul.mubr.f32.gmra.mxu0 %v481
      %v839 = vpop.f32.mrf.mxu0
      %v840 = vadd.f32 %v695, %v839
      %v841 = vpop.f32.mrf.mxu0
      %842 = vdwg.mxu0
      %843 = vst [vmem:[%s194] sm:$0xff] %v765
      %844 = vst [vmem:[%s194 + $0x20] sm:$0xff] %v770
      %845 = vst [vmem:[%s194 + $0x40] sm:$0xff] %v775
      %846 = vst [vmem:[%s194 + $0x60] sm:$0xff] %v780
      %847 = vst [vmem:[%s194 + $0x80] sm:$0xff] %v785
      %848 = vst [vmem:[%s194 + $0xa0] sm:$0xff] %v790
      %849 = vst [vmem:[%s194 + $0xc0] sm:$0xff] %v795
      %850 = vst [vmem:[%s194 + $0xe0] sm:$0xff] %v800
      %851 = vst [vmem:[%s194 + $0x100] sm:$0xff] %v805
      %852 = vst [vmem:[%s194 + $0x120] sm:$0xff] %v810
      %853 = vst [vmem:[%s194 + $0x140] sm:$0xff] %v815
      %854 = vst [vmem:[%s194 + $0x160] sm:$0xff] %v820
      %855 = vst [vmem:[%s194 + $0x180] sm:$0xff] %v825
      %856 = vst [vmem:[%s194 + $0x1a0] sm:$0xff] %v830
      %857 = vst [vmem:[%s194 + $0x1c0] sm:$0xff] %v835
      %858 = vst [vmem:[%s194 + $0x1e0] sm:$0xff] %v840
      %v859 = vld [vmem:[#allocation2] sm:$0xfe]
      %v860 = vld [vmem:[#allocation2 + $0x8] sm:$0xfe]
      %v861 = vld [vmem:[#allocation2 + $0x10] sm:$0xfe]
      %v862 = vld [vmem:[#allocation2 + $0x18] sm:$0xfe]
      %v863 = vld [vmem:[#allocation2 + $0x20] sm:$0xff]
      %v864 = vld [vmem:[#allocation2 + $0x28] sm:$0xff]
      %v865 = vld [vmem:[#allocation2 + $0x30] sm:$0xff]
      %v866 = vld [vmem:[#allocation2 + $0x38] sm:$0xff]
      %v867 = vld [vmem:[#allocation2 + $0x40] sm:$0x1]
      %v868 = vld [vmem:[#allocation2 + $0x48] sm:$0x1]
      %v869 = vld [vmem:[#allocation2 + $0x50] sm:$0x1]
      %v870 = vld [vmem:[#allocation2 + $0x58] sm:$0x1]
      %v871 = vld [vmem:[#allocation2 + $0x60] sm:$0xfe]
      %v872 = vld [vmem:[#allocation2 + $0x68] sm:$0xfe]
      %v873 = vld [vmem:[#allocation2 + $0x70] sm:$0xfe]
      %v874 = vld [vmem:[#allocation2 + $0x78] sm:$0xfe]
      %v875 = vld [vmem:[#allocation2 + $0x80] sm:$0xff]
      %v876 = vld [vmem:[#allocation2 + $0x88] sm:$0xff]
      %v877 = vld [vmem:[#allocation2 + $0x90] sm:$0xff]
      %v878 = vld [vmem:[#allocation2 + $0x98] sm:$0xff]
      %v879 = vld [vmem:[#allocation2 + $0xa0] sm:$0x1]
      %v880 = vld [vmem:[#allocation2 + $0xa8] sm:$0x1]
      %v881 = vld [vmem:[#allocation2 + $0xb0] sm:$0x1]
      %v882 = vld [vmem:[#allocation2 + $0xb8] sm:$0x1]
      %v883 = vld [vmem:[#allocation2 + $0xc0] sm:$0xfe]
      %v884 = vld [vmem:[#allocation2 + $0xc8] sm:$0xfe]
      %v885 = vld [vmem:[#allocation2 + $0xd0] sm:$0xfe]
      %v886 = vld [vmem:[#allocation2 + $0xd8] sm:$0xfe]
      %v887 = vld [vmem:[#allocation2 + $0xe0] sm:$0xff]
      %v888 = vld [vmem:[#allocation2 + $0xe8] sm:$0xff]
      %v889 = vld [vmem:[#allocation2 + $0xf0] sm:$0xff]
      %v890 = vld [vmem:[#allocation2 + $0xf8] sm:$0xff]
      %v891 = vld [vmem:[#allocation2 + $0x100] sm:$0x1]
      %v892 = vld [vmem:[#allocation2 + $0x108] sm:$0x1]
      %v893 = vld [vmem:[#allocation2 + $0x110] sm:$0x1]
      %v894 = vld [vmem:[#allocation2 + $0x118] sm:$0x1]
      %v895 = vld [vmem:[#allocation2 + $0x120] sm:$0xfe]
      %v896 = vld [vmem:[#allocation2 + $0x128] sm:$0xfe]
      %v897 = vld [vmem:[#allocation2 + $0x130] sm:$0xfe]
      %v898 = vld [vmem:[#allocation2 + $0x138] sm:$0xfe]
      %v899 = vld [vmem:[#allocation2 + $0x140] sm:$0xff]
      %v900 = vld [vmem:[#allocation2 + $0x148] sm:$0xff]
      %v901 = vld [vmem:[#allocation2 + $0x150] sm:$0xff]
      %v902 = vld [vmem:[#allocation2 + $0x158] sm:$0xff]
      %v903 = vld [vmem:[#allocation2 + $0x160] sm:$0x1]
      %v904 = vld [vmem:[#allocation2 + $0x168] sm:$0x1]
      %v905 = vld [vmem:[#allocation2 + $0x170] sm:$0x1]
      %v906 = vld [vmem:[#allocation2 + $0x178] sm:$0x1]
      %v907 = vld [vmem:[#allocation2 + $0x180] sm:$0xfe]
      %v908 = vld [vmem:[#allocation2 + $0x188] sm:$0xfe]
      %v909 = vld [vmem:[#allocation2 + $0x190] sm:$0xfe]
      %v910 = vld [vmem:[#allocation2 + $0x198] sm:$0xfe]
      %v911 = vld [vmem:[#allocation2 + $0x1a0] sm:$0xff]
      %v912 = vld [vmem:[#allocation2 + $0x1a8] sm:$0xff]
      %v913 = vld [vmem:[#allocation2 + $0x1b0] sm:$0xff]
      %v914 = vld [vmem:[#allocation2 + $0x1b8] sm:$0xff]
      %v915 = vld [vmem:[#allocation2 + $0x1c0] sm:$0x1]
      %v916 = vld [vmem:[#allocation2 + $0x1c8] sm:$0x1]
      %v917 = vld [vmem:[#allocation2 + $0x1d0] sm:$0x1]
      %v918 = vld [vmem:[#allocation2 + $0x1d8] sm:$0x1]
      %v919 = vld [vmem:[#allocation2 + $0x1e0] sm:$0xfe]
      %v920 = vld [vmem:[#allocation2 + $0x1e8] sm:$0xfe]
      %v921 = vld [vmem:[#allocation2 + $0x1f0] sm:$0xfe]
      %v922 = vld [vmem:[#allocation2 + $0x1f8] sm:$0xfe]
      %v923 = vld [vmem:[#allocation2 + $0x200] sm:$0xff]
      %v924 = vld [vmem:[#allocation2 + $0x208] sm:$0xff]
      %v925 = vld [vmem:[#allocation2 + $0x210] sm:$0xff]
      %v926 = vld [vmem:[#allocation2 + $0x218] sm:$0xff]
      %v927 = vld [vmem:[#allocation2 + $0x220] sm:$0x1]
      %v928 = vld [vmem:[#allocation2 + $0x228] sm:$0x1]
      %v929 = vld [vmem:[#allocation2 + $0x230] sm:$0x1]
      %v930 = vld [vmem:[#allocation2 + $0x238] sm:$0x1]
      %v931 = vld [vmem:[#allocation2 + $0x240] sm:$0xfe]
      %v932 = vld [vmem:[#allocation2 + $0x248] sm:$0xfe]
      %v933 = vld [vmem:[#allocation2 + $0x250] sm:$0xfe]
      %v934 = vld [vmem:[#allocation2 + $0x258] sm:$0xfe]
      %v935 = vld [vmem:[#allocation2 + $0x260] sm:$0xff]
      %v936 = vld [vmem:[#allocation2 + $0x268] sm:$0xff]
      %v937 = vld [vmem:[#allocation2 + $0x270] sm:$0xff]
      %v938 = vld [vmem:[#allocation2 + $0x278] sm:$0xff]
      %v939 = vld [vmem:[#allocation2 + $0x280] sm:$0x1]
      %v940 = vld [vmem:[#allocation2 + $0x288] sm:$0x1]
      %v941 = vld [vmem:[#allocation2 + $0x290] sm:$0x1]
      %v942 = vld [vmem:[#allocation2 + $0x298] sm:$0x1]
      %v943 = vld [vmem:[#allocation2 + $0x2a0] sm:$0xfe]
      %v944 = vld [vmem:[#allocation2 + $0x2a8] sm:$0xfe]
      %v945 = vld [vmem:[#allocation2 + $0x2b0] sm:$0xfe]
      %v946 = vld [vmem:[#allocation2 + $0x2b8] sm:$0xfe]
      %v947 = vld [vmem:[#allocation2 + $0x2c0] sm:$0xff]
      %v948 = vld [vmem:[#allocation2 + $0x2c8] sm:$0xff]
      %v949 = vld [vmem:[#allocation2 + $0x2d0] sm:$0xff]
      %v950 = vld [vmem:[#allocation2 + $0x2d8] sm:$0xff]
      %v951 = vld [vmem:[#allocation2 + $0x2e0] sm:$0x1]
      %v952 = vld [vmem:[#allocation2 + $0x2e8] sm:$0x1]
      %v953 = vld [vmem:[#allocation2 + $0x2f0] sm:$0x1]
      %v954 = vld [vmem:[#allocation2 + $0x2f8] sm:$0x1]
      %vm1051 = vcmask 1046528
      %v1052 = vrot.slane %v859, 1
      %v1053 = vrot.slane %v863, 1
      %v1054 = vsel %vm1051, %v1052, %v1053
      %v1055 = vrot.slane %v860, 1
      %v1056 = vrot.slane %v864, 1
      %v1057 = vsel %vm1051, %v1055, %v1056
      %v1058 = vrot.slane %v861, 1
      %v1059 = vrot.slane %v865, 1
      %v1060 = vsel %vm1051, %v1058, %v1059
      %v1061 = vrot.slane %v862, 1
      %v1062 = vrot.slane %v866, 1
      %v1063 = vsel %vm1051, %v1061, %v1062
      %v1064 = vrot.slane %v867, 1
      %v1065 = vsel %vm1051, %v1053, %v1064
      %v1066 = vrot.slane %v868, 1
      %v1067 = vsel %vm1051, %v1056, %v1066
      %v1068 = vrot.slane %v869, 1
      %v1069 = vsel %vm1051, %v1059, %v1068
      %v1070 = vrot.slane %v870, 1
      %v1071 = vsel %vm1051, %v1062, %v1070
      %v1072 = vrot.slane %v871, 1
      %v1073 = vrot.slane %v875, 1
      %v1074 = vsel %vm1051, %v1072, %v1073
      %v1075 = vrot.slane %v872, 1
      %v1076 = vrot.slane %v876, 1
      %v1077 = vsel %vm1051, %v1075, %v1076
      %v1078 = vrot.slane %v873, 1
      %v1079 = vrot.slane %v877, 1
      %v1080 = vsel %vm1051, %v1078, %v1079
      %v1081 = vrot.slane %v874, 1
      %v1082 = vrot.slane %v878, 1
      %v1083 = vsel %vm1051, %v1081, %v1082
      %v1084 = vrot.slane %v879, 1
      %v1085 = vsel %vm1051, %v1073, %v1084
      %v1086 = vrot.slane %v880, 1
      %v1087 = vsel %vm1051, %v1076, %v1086
      %v1088 = vrot.slane %v881, 1
      %v1089 = vsel %vm1051, %v1079, %v1088
      %v1090 = vrot.slane %v882, 1
      %v1091 = vsel %vm1051, %v1082, %v1090
      %v1092 = vrot.slane %v883, 1
      %v1093 = vrot.slane %v887, 1
      %v1094 = vsel %vm1051, %v1092, %v1093
      %v1095 = vrot.slane %v884, 1
      %v1096 = vrot.slane %v888, 1
      %v1097 = vsel %vm1051, %v1095, %v1096
      %v1098 = vrot.slane %v885, 1
      %v1099 = vrot.slane %v889, 1
      %v1100 = vsel %vm1051, %v1098, %v1099
      %v1101 = vrot.slane %v886, 1
      %v1102 = vrot.slane %v890, 1
      %v1103 = vsel %vm1051, %v1101, %v1102
      %v1104 = vrot.slane %v891, 1
      %v1105 = vsel %vm1051, %v1093, %v1104
      %v1106 = vrot.slane %v892, 1
      %v1107 = vsel %vm1051, %v1096, %v1106
      %v1108 = vrot.slane %v893, 1
      %v1109 = vsel %vm1051, %v1099, %v1108
      %v1110 = vrot.slane %v894, 1
      %v1111 = vsel %vm1051, %v1102, %v1110
      %v1112 = vrot.slane %v895, 1
      %v1113 = vrot.slane %v899, 1
      %v1114 = vsel %vm1051, %v1112, %v1113
      %v1115 = vrot.slane %v896, 1
      %v1116 = vrot.slane %v900, 1
      %v1117 = vsel %vm1051, %v1115, %v1116
      %v1118 = vrot.slane %v897, 1
      %v1119 = vrot.slane %v901, 1
      %v1120 = vsel %vm1051, %v1118, %v1119
      %v1121 = vrot.slane %v898, 1
      %v1122 = vrot.slane %v902, 1
      %v1123 = vsel %vm1051, %v1121, %v1122
      %v1124 = vrot.slane %v903, 1
      %v1125 = vsel %vm1051, %v1113, %v1124
      %v1126 = vrot.slane %v904, 1
      %v1127 = vsel %vm1051, %v1116, %v1126
      %v1128 = vrot.slane %v905, 1
      %v1129 = vsel %vm1051, %v1119, %v1128
      %v1130 = vrot.slane %v906, 1
      %v1131 = vsel %vm1051, %v1122, %v1130
      %v1132 = vrot.slane %v907, 1
      %v1133 = vrot.slane %v911, 1
      %v1134 = vsel %vm1051, %v1132, %v1133
      %v1135 = vrot.slane %v908, 1
      %v1136 = vrot.slane %v912, 1
      %v1137 = vsel %vm1051, %v1135, %v1136
      %v1138 = vrot.slane %v909, 1
      %v1139 = vrot.slane %v913, 1
      %v1140 = vsel %vm1051, %v1138, %v1139
      %v1141 = vrot.slane %v910, 1
      %v1142 = vrot.slane %v914, 1
      %v1143 = vsel %vm1051, %v1141, %v1142
      %v1144 = vrot.slane %v915, 1
      %v1145 = vsel %vm1051, %v1133, %v1144
      %v1146 = vrot.slane %v916, 1
      %v1147 = vsel %vm1051, %v1136, %v1146
      %v1148 = vrot.slane %v917, 1
      %v1149 = vsel %vm1051, %v1139, %v1148
      %v1150 = vrot.slane %v918, 1
      %v1151 = vsel %vm1051, %v1142, %v1150
      %v1152 = vrot.slane %v919, 1
      %v1153 = vrot.slane %v923, 1
      %v1154 = vsel %vm1051, %v1152, %v1153
      %v1155 = vrot.slane %v920, 1
      %v1156 = vrot.slane %v924, 1
      %v1157 = vsel %vm1051, %v1155, %v1156
      %v1158 = vrot.slane %v921, 1
      %v1159 = vrot.slane %v925, 1
      %v1160 = vsel %vm1051, %v1158, %v1159
      %v1161 = vrot.slane %v922, 1
      %v1162 = vrot.slane %v926, 1
      %v1163 = vsel %vm1051, %v1161, %v1162
      %v1164 = vrot.slane %v927, 1
      %v1165 = vsel %vm1051, %v1153, %v1164
      %v1166 = vrot.slane %v928, 1
      %v1167 = vsel %vm1051, %v1156, %v1166
      %v1168 = vrot.slane %v929, 1
      %v1169 = vsel %vm1051, %v1159, %v1168
      %v1170 = vrot.slane %v930, 1
      %v1171 = vsel %vm1051, %v1162, %v1170
      %v1172 = vrot.slane %v931, 1
      %v1173 = vrot.slane %v935, 1
      %v1174 = vsel %vm1051, %v1172, %v1173
      %v1175 = vrot.slane %v932, 1
      %v1176 = vrot.slane %v936, 1
      %v1177 = vsel %vm1051, %v1175, %v1176
      %v1178 = vrot.slane %v933, 1
      %v1179 = vrot.slane %v937, 1
      %v1180 = vsel %vm1051, %v1178, %v1179
      %v1181 = vrot.slane %v934, 1
      %v1182 = vrot.slane %v938, 1
      %v1183 = vsel %vm1051, %v1181, %v1182
      %v1184 = vrot.slane %v939, 1
      %v1185 = vsel %vm1051, %v1173, %v1184
      %v1186 = vrot.slane %v940, 1
      %v1187 = vsel %vm1051, %v1176, %v1186
      %v1188 = vrot.slane %v941, 1
      %v1189 = vsel %vm1051, %v1179, %v1188
      %v1190 = vrot.slane %v942, 1
      %v1191 = vsel %vm1051, %v1182, %v1190
      %v1192 = vrot.slane %v943, 1
      %v1193 = vrot.slane %v947, 1
      %v1194 = vsel %vm1051, %v1192, %v1193
      %v1195 = vrot.slane %v944, 1
      %v1196 = vrot.slane %v948, 1
      %v1197 = vsel %vm1051, %v1195, %v1196
      %v1198 = vrot.slane %v945, 1
      %v1199 = vrot.slane %v949, 1
      %v1200 = vsel %vm1051, %v1198, %v1199
      %v1201 = vrot.slane %v946, 1
      %v1202 = vrot.slane %v950, 1
      %v1203 = vsel %vm1051, %v1201, %v1202
      %v1204 = vrot.slane %v951, 1
      %v1205 = vsel %vm1051, %v1193, %v1204
      %v1206 = vrot.slane %v952, 1
      %v1207 = vsel %vm1051, %v1196, %v1206
      %v1208 = vrot.slane %v953, 1
      %v1209 = vsel %vm1051, %v1199, %v1208
      %v1210 = vrot.slane %v954, 1
      %v1211 = vsel %vm1051, %v1202, %v1210
      %s1276 = scalar_lea.vmem %s1, 512
      %v1277 = vld [vmem:[%s1276] sm:$0xff]
      %v1278 = vld [vmem:[%s1276 + $0x8] sm:$0xff]
      %v1279 = vld [vmem:[%s1276 + $0x10] sm:$0xff]
      %v1280 = vld [vmem:[%s1276 + $0x18] sm:$0xff]
      %v1281 = vld [vmem:[%s1276 + $0x20] sm:$0xff]
      %v1282 = vld [vmem:[%s1276 + $0x28] sm:$0xff]
      %v1283 = vld [vmem:[%s1276 + $0x30] sm:$0xff]
      %v1284 = vld [vmem:[%s1276 + $0x38] sm:$0xff]
      %v1285 = vld [vmem:[%s1276 + $0x40] sm:$0xff]
      %v1286 = vld [vmem:[%s1276 + $0x48] sm:$0xff]
      %v1287 = vld [vmem:[%s1276 + $0x50] sm:$0xff]
      %v1288 = vld [vmem:[%s1276 + $0x58] sm:$0xff]
      %v1289 = vld [vmem:[%s1276 + $0x60] sm:$0xff]
      %v1290 = vld [vmem:[%s1276 + $0x68] sm:$0xff]
      %v1291 = vld [vmem:[%s1276 + $0x70] sm:$0xff]
      %v1292 = vld [vmem:[%s1276 + $0x78] sm:$0xff]
      %v1293 = vld [vmem:[%s1276 + $0x80] sm:$0xff]
      %v1294 = vld [vmem:[%s1276 + $0x88] sm:$0xff]
      %v1295 = vld [vmem:[%s1276 + $0x90] sm:$0xff]
      %v1296 = vld [vmem:[%s1276 + $0x98] sm:$0xff]
      %v1297 = vld [vmem:[%s1276 + $0xa0] sm:$0xff]
      %v1298 = vld [vmem:[%s1276 + $0xa8] sm:$0xff]
      %v1299 = vld [vmem:[%s1276 + $0xb0] sm:$0xff]
      %v1300 = vld [vmem:[%s1276 + $0xb8] sm:$0xff]
      %v1301 = vld [vmem:[%s1276 + $0xc0] sm:$0xff]
      %v1302 = vld [vmem:[%s1276 + $0xc8] sm:$0xff]
      %v1303 = vld [vmem:[%s1276 + $0xd0] sm:$0xff]
      %v1304 = vld [vmem:[%s1276 + $0xd8] sm:$0xff]
      %v1305 = vld [vmem:[%s1276 + $0xe0] sm:$0xff]
      %v1306 = vld [vmem:[%s1276 + $0xe8] sm:$0xff]
      %v1307 = vld [vmem:[%s1276 + $0xf0] sm:$0xff]
      %v1308 = vld [vmem:[%s1276 + $0xf8] sm:$0xff]
      %v1309 = vld [vmem:[%s1276 + $0x100] sm:$0xff]
      %v1310 = vld [vmem:[%s1276 + $0x108] sm:$0xff]
      %v1311 = vld [vmem:[%s1276 + $0x110] sm:$0xff]
      %v1312 = vld [vmem:[%s1276 + $0x118] sm:$0xff]
      %v1313 = vld [vmem:[%s1276 + $0x120] sm:$0xff]
      %v1314 = vld [vmem:[%s1276 + $0x128] sm:$0xff]
      %v1315 = vld [vmem:[%s1276 + $0x130] sm:$0xff]
      %v1316 = vld [vmem:[%s1276 + $0x138] sm:$0xff]
      %v1317 = vld [vmem:[%s1276 + $0x140] sm:$0xff]
      %v1318 = vld [vmem:[%s1276 + $0x148] sm:$0xff]
      %v1319 = vld [vmem:[%s1276 + $0x150] sm:$0xff]
      %v1320 = vld [vmem:[%s1276 + $0x158] sm:$0xff]
      %v1321 = vld [vmem:[%s1276 + $0x160] sm:$0xff]
      %v1322 = vld [vmem:[%s1276 + $0x168] sm:$0xff]
      %v1323 = vld [vmem:[%s1276 + $0x170] sm:$0xff]
      %v1324 = vld [vmem:[%s1276 + $0x178] sm:$0xff]
      %v1325 = vld [vmem:[%s1276 + $0x180] sm:$0xff]
      %v1326 = vld [vmem:[%s1276 + $0x188] sm:$0xff]
      %v1327 = vld [vmem:[%s1276 + $0x190] sm:$0xff]
      %v1328 = vld [vmem:[%s1276 + $0x198] sm:$0xff]
      %v1329 = vld [vmem:[%s1276 + $0x1a0] sm:$0xff]
      %v1330 = vld [vmem:[%s1276 + $0x1a8] sm:$0xff]
      %v1331 = vld [vmem:[%s1276 + $0x1b0] sm:$0xff]
      %v1332 = vld [vmem:[%s1276 + $0x1b8] sm:$0xff]
      %v1333 = vld [vmem:[%s1276 + $0x1c0] sm:$0xff]
      %v1334 = vld [vmem:[%s1276 + $0x1c8] sm:$0xff]
      %v1335 = vld [vmem:[%s1276 + $0x1d0] sm:$0xff]
      %v1336 = vld [vmem:[%s1276 + $0x1d8] sm:$0xff]
      %v1337 = vld [vmem:[%s1276 + $0x1e0] sm:$0xff]
      %v1338 = vld [vmem:[%s1276 + $0x1e8] sm:$0xff]
      %v1339 = vld [vmem:[%s1276 + $0x1f0] sm:$0xff]
      %v1340 = vld [vmem:[%s1276 + $0x1f8] sm:$0xff]
      %1341 = vmatprep.subr.mxu0 0.0
      %1342 = vmatpush1.msra.mxu0 %v1292
      %1343 = vmatprep.subr.mxu0 0.0
      %1344 = vmatpush1.msra.mxu0 %v1291
      %1345 = vmatprep.subr.mxu0 0.0
      %1346 = vmatpush1.msra.mxu0 %v1290
      %1347 = vmatprep.subr.mxu0 0.0
      %1348 = vmatpush1.msra.mxu0 %v1289
      %1349 = vmatprep.subr.mxu0 0.0
      %1350 = vmatpush1.msra.mxu0 %v1288
      %1351 = vmatprep.subr.mxu0 0.0
      %1352 = vmatpush1.msra.mxu0 %v1287
      %1353 = vmatprep.subr.mxu0 0.0
      %1354 = vmatpush1.msra.mxu0 %v1286
      %1355 = vmatprep.subr.mxu0 0.0
      %1356 = vmatpush1.msra.mxu0 %v1285
      %1357 = vmatprep.subr.mxu0 0.0
      %1358 = vmatpush1.msra.mxu0 %v1284
      %1359 = vmatprep.subr.mxu0 0.0
      %1360 = vmatpush1.msra.mxu0 %v1283
      %1361 = vmatprep.subr.mxu0 0.0
      %1362 = vmatpush1.msra.mxu0 %v1282
      %1363 = vmatprep.subr.mxu0 0.0
      %1364 = vmatpush1.msra.mxu0 %v1281
      %1365 = vmatprep.subr.mxu0 0.0
      %1366 = vmatpush1.msra.mxu0 %v1280
      %1367 = vmatprep.subr.mxu0 0.0
      %1368 = vmatpush1.msra.mxu0 %v1279
      %1369 = vmatprep.subr.mxu0 0.0
      %1370 = vmatpush1.msra.mxu0 %v1278
      %1371 = vmatprep.subr.mxu0 0.0
      %1372 = vmatpush1.msra.mxu0 %v1277
      %1373 = vmatprep.subr.mxu0 0.0
      %1374 = vmatpush2.msra.mxu0 %v1308
      %1375 = vmatprep.subr.mxu0 0.0
      %1376 = vmatpush2.msra.mxu0 %v1307
      %1377 = vmatprep.subr.mxu0 0.0
      %1378 = vmatpush2.msra.mxu0 %v1306
      %1379 = vmatprep.subr.mxu0 0.0
      %1380 = vmatpush2.msra.mxu0 %v1305
      %1381 = vmatprep.subr.mxu0 0.0
      %1382 = vmatpush2.msra.mxu0 %v1304
      %1383 = vmatprep.subr.mxu0 0.0
      %1384 = vmatpush2.msra.mxu0 %v1303
      %1385 = vmatprep.subr.mxu0 0.0
      %1386 = vmatpush2.msra.mxu0 %v1302
      %1387 = vmatprep.subr.mxu0 0.0
      %1388 = vmatpush2.msra.mxu0 %v1301
      %1389 = vmatprep.subr.mxu0 0.0
      %1390 = vmatpush2.msra.mxu0 %v1300
      %1391 = vmatprep.subr.mxu0 0.0
      %1392 = vmatpush2.msra.mxu0 %v1299
      %1393 = vmatprep.subr.mxu0 0.0
      %1394 = vmatpush2.msra.mxu0 %v1298
      %1395 = vmatprep.subr.mxu0 0.0
      %1396 = vmatpush2.msra.mxu0 %v1297
      %1397 = vmatprep.subr.mxu0 0.0
      %1398 = vmatpush2.msra.mxu0 %v1296
      %1399 = vmatprep.subr.mxu0 0.0
      %1400 = vmatpush2.msra.mxu0 %v1295
      %1401 = vmatprep.subr.mxu0 0.0
      %1402 = vmatpush2.msra.mxu0 %v1294
      %1403 = vmatprep.subr.mxu0 0.0
      %1404 = vmatpush2.msra.mxu0 %v1293
      %1405 = vmatprep.mubr.f32.mxu0 %v1057
      %1406 = vmatmul.mubr.f32.gmra.mxu0 %v1054
      %v1407 = vpop.f32.mrf.mxu0
      %v1408 = vadd.f32 %v551, %v1407
      %v1409 = vpop.f32.mrf.mxu0
      %1410 = vmatprep.mubr.f32.mxu0 %v1067
      %1411 = vmatmul.mubr.f32.gmra.mxu0 %v1065
      %v1412 = vpop.f32.mrf.mxu0
      %v1413 = vadd.f32 %v551, %v1412
      %v1414 = vpop.f32.mrf.mxu0
      %1415 = vmatprep.mubr.f32.mxu0 %v1077
      %1416 = vmatmul.mubr.f32.gmra.mxu0 %v1074
      %v1417 = vpop.f32.mrf.mxu0
      %v1418 = vadd.f32 %v551, %v1417
      %v1419 = vpop.f32.mrf.mxu0
      %1420 = vmatprep.mubr.f32.mxu0 %v1087
      %1421 = vmatmul.mubr.f32.gmra.mxu0 %v1085
      %v1422 = vpop.f32.mrf.mxu0
      %v1423 = vadd.f32 %v551, %v1422
      %v1424 = vpop.f32.mrf.mxu0
      %1425 = vmatprep.mubr.f32.mxu0 %v1097
      %1426 = vmatmul.mubr.f32.gmra.mxu0 %v1094
      %v1427 = vpop.f32.mrf.mxu0
      %v1428 = vadd.f32 %v551, %v1427
      %v1429 = vpop.f32.mrf.mxu0
      %1430 = vmatprep.mubr.f32.mxu0 %v1107
      %1431 = vmatmul.mubr.f32.gmra.mxu0 %v1105
      %v1432 = vpop.f32.mrf.mxu0
      %v1433 = vadd.f32 %v551, %v1432
      %v1434 = vpop.f32.mrf.mxu0
      %1435 = vmatprep.mubr.f32.mxu0 %v1117
      %1436 = vmatmul.mubr.f32.gmra.mxu0 %v1114
      %v1437 = vpop.f32.mrf.mxu0
      %v1438 = vadd.f32 %v551, %v1437
      %v1439 = vpop.f32.mrf.mxu0
      %1440 = vmatprep.mubr.f32.mxu0 %v1127
      %1441 = vmatmul.mubr.f32.gmra.mxu0 %v1125
      %v1442 = vpop.f32.mrf.mxu0
      %v1443 = vadd.f32 %v551, %v1442
      %v1444 = vpop.f32.mrf.mxu0
      %1445 = vmatprep.mubr.f32.mxu0 %v1137
      %1446 = vmatmul.mubr.f32.gmra.mxu0 %v1134
      %v1447 = vpop.f32.mrf.mxu0
      %v1448 = vadd.f32 %v551, %v1447
      %v1449 = vpop.f32.mrf.mxu0
      %1450 = vmatprep.mubr.f32.mxu0 %v1147
      %1451 = vmatmul.mubr.f32.gmra.mxu0 %v1145
      %v1452 = vpop.f32.mrf.mxu0
      %v1453 = vadd.f32 %v551, %v1452
      %v1454 = vpop.f32.mrf.mxu0
      %1455 = vmatprep.mubr.f32.mxu0 %v1157
      %1456 = vmatmul.mubr.f32.gmra.mxu0 %v1154
      %v1457 = vpop.f32.mrf.mxu0
      %v1458 = vadd.f32 %v551, %v1457
      %v1459 = vpop.f32.mrf.mxu0
      %1460 = vmatprep.mubr.f32.mxu0 %v1167
      %1461 = vmatmul.mubr.f32.gmra.mxu0 %v1165
      %v1462 = vpop.f32.mrf.mxu0
      %v1463 = vadd.f32 %v551, %v1462
      %v1464 = vpop.f32.mrf.mxu0
      %1465 = vmatprep.mubr.f32.mxu0 %v1177
      %1466 = vmatmul.mubr.f32.gmra.mxu0 %v1174
      %v1467 = vpop.f32.mrf.mxu0
      %v1468 = vadd.f32 %v551, %v1467
      %v1469 = vpop.f32.mrf.mxu0
      %1470 = vmatprep.mubr.f32.mxu0 %v1187
      %1471 = vmatmul.mubr.f32.gmra.mxu0 %v1185
      %v1472 = vpop.f32.mrf.mxu0
      %v1473 = vadd.f32 %v551, %v1472
      %v1474 = vpop.f32.mrf.mxu0
      %1475 = vmatprep.mubr.f32.mxu0 %v1197
      %1476 = vmatmul.mubr.f32.gmra.mxu0 %v1194
      %v1477 = vpop.f32.mrf.mxu0
      %v1478 = vadd.f32 %v551, %v1477
      %v1479 = vpop.f32.mrf.mxu0
      %1480 = vmatprep.mubr.f32.mxu0 %v1207
      %1481 = vmatmul.mubr.f32.gmra.mxu0 %v1205
      %v1482 = vpop.f32.mrf.mxu0
      %v1483 = vadd.f32 %v551, %v1482
      %v1484 = vpop.f32.mrf.mxu0
      %1485 = vdwg.mxu0
      %1486 = vmatprep.subr.mxu0 0.0
      %1487 = vmatpush1.msra.mxu0 %v1324
      %1488 = vmatprep.subr.mxu0 0.0
      %1489 = vmatpush1.msra.mxu0 %v1323
      %1490 = vmatprep.subr.mxu0 0.0
      %1491 = vmatpush1.msra.mxu0 %v1322
      %1492 = vmatprep.subr.mxu0 0.0
      %1493 = vmatpush1.msra.mxu0 %v1321
      %1494 = vmatprep.subr.mxu0 0.0
      %1495 = vmatpush1.msra.mxu0 %v1320
      %1496 = vmatprep.subr.mxu0 0.0
      %1497 = vmatpush1.msra.mxu0 %v1319
      %1498 = vmatprep.subr.mxu0 0.0
      %1499 = vmatpush1.msra.mxu0 %v1318
      %1500 = vmatprep.subr.mxu0 0.0
      %1501 = vmatpush1.msra.mxu0 %v1317
      %1502 = vmatprep.subr.mxu0 0.0
      %1503 = vmatpush1.msra.mxu0 %v1316
      %1504 = vmatprep.subr.mxu0 0.0
      %1505 = vmatpush1.msra.mxu0 %v1315
      %1506 = vmatprep.subr.mxu0 0.0
      %1507 = vmatpush1.msra.mxu0 %v1314
      %1508 = vmatprep.subr.mxu0 0.0
      %1509 = vmatpush1.msra.mxu0 %v1313
      %1510 = vmatprep.subr.mxu0 0.0
      %1511 = vmatpush1.msra.mxu0 %v1312
      %1512 = vmatprep.subr.mxu0 0.0
      %1513 = vmatpush1.msra.mxu0 %v1311
      %1514 = vmatprep.subr.mxu0 0.0
      %1515 = vmatpush1.msra.mxu0 %v1310
      %1516 = vmatprep.subr.mxu0 0.0
      %1517 = vmatpush1.msra.mxu0 %v1309
      %1518 = vmatprep.subr.mxu0 0.0
      %1519 = vmatpush2.msra.mxu0 %v1340
      %1520 = vmatprep.subr.mxu0 0.0
      %1521 = vmatpush2.msra.mxu0 %v1339
      %1522 = vmatprep.subr.mxu0 0.0
      %1523 = vmatpush2.msra.mxu0 %v1338
      %1524 = vmatprep.subr.mxu0 0.0
      %1525 = vmatpush2.msra.mxu0 %v1337
      %1526 = vmatprep.subr.mxu0 0.0
      %1527 = vmatpush2.msra.mxu0 %v1336
      %1528 = vmatprep.subr.mxu0 0.0
      %1529 = vmatpush2.msra.mxu0 %v1335
      %1530 = vmatprep.subr.mxu0 0.0
      %1531 = vmatpush2.msra.mxu0 %v1334
      %1532 = vmatprep.subr.mxu0 0.0
      %1533 = vmatpush2.msra.mxu0 %v1333
      %1534 = vmatprep.subr.mxu0 0.0
      %1535 = vmatpush2.msra.mxu0 %v1332
      %1536 = vmatprep.subr.mxu0 0.0
      %1537 = vmatpush2.msra.mxu0 %v1331
      %1538 = vmatprep.subr.mxu0 0.0
      %1539 = vmatpush2.msra.mxu0 %v1330
      %1540 = vmatprep.subr.mxu0 0.0
      %1541 = vmatpush2.msra.mxu0 %v1329
      %1542 = vmatprep.subr.mxu0 0.0
      %1543 = vmatpush2.msra.mxu0 %v1328
      %1544 = vmatprep.subr.mxu0 0.0
      %1545 = vmatpush2.msra.mxu0 %v1327
      %1546 = vmatprep.subr.mxu0 0.0
      %1547 = vmatpush2.msra.mxu0 %v1326
      %1548 = vmatprep.subr.mxu0 0.0
      %1549 = vmatpush2.msra.mxu0 %v1325
      %1550 = vmatprep.mubr.f32.mxu0 %v1063
      %1551 = vmatmul.mubr.f32.gmra.mxu0 %v1060
      %v1552 = vpop.f32.mrf.mxu0
      %v1553 = vadd.f32 %v1408, %v1552
      %v1554 = vpop.f32.mrf.mxu0
      %1555 = vmatprep.mubr.f32.mxu0 %v1071
      %1556 = vmatmul.mubr.f32.gmra.mxu0 %v1069
      %v1557 = vpop.f32.mrf.mxu0
      %v1558 = vadd.f32 %v1413, %v1557
      %v1559 = vpop.f32.mrf.mxu0
      %1560 = vmatprep.mubr.f32.mxu0 %v1083
      %1561 = vmatmul.mubr.f32.gmra.mxu0 %v1080
      %v1562 = vpop.f32.mrf.mxu0
      %v1563 = vadd.f32 %v1418, %v1562
      %v1564 = vpop.f32.mrf.mxu0
      %1565 = vmatprep.mubr.f32.mxu0 %v1091
      %1566 = vmatmul.mubr.f32.gmra.mxu0 %v1089
      %v1567 = vpop.f32.mrf.mxu0
      %v1568 = vadd.f32 %v1423, %v1567
      %v1569 = vpop.f32.mrf.mxu0
      %1570 = vmatprep.mubr.f32.mxu0 %v1103
      %1571 = vmatmul.mubr.f32.gmra.mxu0 %v1100
      %v1572 = vpop.f32.mrf.mxu0
      %v1573 = vadd.f32 %v1428, %v1572
      %v1574 = vpop.f32.mrf.mxu0
      %1575 = vmatprep.mubr.f32.mxu0 %v1111
      %1576 = vmatmul.mubr.f32.gmra.mxu0 %v1109
      %v1577 = vpop.f32.mrf.mxu0
      %v1578 = vadd.f32 %v1433, %v1577
      %v1579 = vpop.f32.mrf.mxu0
      %1580 = vmatprep.mubr.f32.mxu0 %v1123
      %1581 = vmatmul.mubr.f32.gmra.mxu0 %v1120
      %v1582 = vpop.f32.mrf.mxu0
      %v1583 = vadd.f32 %v1438, %v1582
      %v1584 = vpop.f32.mrf.mxu0
      %1585 = vmatprep.mubr.f32.mxu0 %v1131
      %1586 = vmatmul.mubr.f32.gmra.mxu0 %v1129
      %v1587 = vpop.f32.mrf.mxu0
      %v1588 = vadd.f32 %v1443, %v1587
      %v1589 = vpop.f32.mrf.mxu0
      %1590 = vmatprep.mubr.f32.mxu0 %v1143
      %1591 = vmatmul.mubr.f32.gmra.mxu0 %v1140
      %v1592 = vpop.f32.mrf.mxu0
      %v1593 = vadd.f32 %v1448, %v1592
      %v1594 = vpop.f32.mrf.mxu0
      %1595 = vmatprep.mubr.f32.mxu0 %v1151
      %1596 = vmatmul.mubr.f32.gmra.mxu0 %v1149
      %v1597 = vpop.f32.mrf.mxu0
      %v1598 = vadd.f32 %v1453, %v1597
      %v1599 = vpop.f32.mrf.mxu0
      %1600 = vmatprep.mubr.f32.mxu0 %v1163
      %1601 = vmatmul.mubr.f32.gmra.mxu0 %v1160
      %v1602 = vpop.f32.mrf.mxu0
      %v1603 = vadd.f32 %v1458, %v1602
      %v1604 = vpop.f32.mrf.mxu0
      %1605 = vmatprep.mubr.f32.mxu0 %v1171
      %1606 = vmatmul.mubr.f32.gmra.mxu0 %v1169
      %v1607 = vpop.f32.mrf.mxu0
      %v1608 = vadd.f32 %v1463, %v1607
      %v1609 = vpop.f32.mrf.mxu0
      %1610 = vmatprep.mubr.f32.mxu0 %v1183
      %1611 = vmatmul.mubr.f32.gmra.mxu0 %v1180
      %v1612 = vpop.f32.mrf.mxu0
      %v1613 = vadd.f32 %v1468, %v1612
      %v1614 = vpop.f32.mrf.mxu0
      %1615 = vmatprep.mubr.f32.mxu0 %v1191
      %1616 = vmatmul.mubr.f32.gmra.mxu0 %v1189
      %v1617 = vpop.f32.mrf.mxu0
      %v1618 = vadd.f32 %v1473, %v1617
      %v1619 = vpop.f32.mrf.mxu0
      %1620 = vmatprep.mubr.f32.mxu0 %v1203
      %1621 = vmatmul.mubr.f32.gmra.mxu0 %v1200
      %v1622 = vpop.f32.mrf.mxu0
      %v1623 = vadd.f32 %v1478, %v1622
      %v1624 = vpop.f32.mrf.mxu0
      %1625 = vmatprep.mubr.f32.mxu0 %v1211
      %1626 = vmatmul.mubr.f32.gmra.mxu0 %v1209
      %v1627 = vpop.f32.mrf.mxu0
      %v1628 = vadd.f32 %v1483, %v1627
      %v1629 = vpop.f32.mrf.mxu0
      %1630 = vdwg.mxu0
      %1631 = vst [vmem:[%s194 + $0x8] sm:$0xff] %v1553
      %1632 = vst [vmem:[%s194 + $0x28] sm:$0xff] %v1558
      %1633 = vst [vmem:[%s194 + $0x48] sm:$0xff] %v1563
      %1634 = vst [vmem:[%s194 + $0x68] sm:$0xff] %v1568
      %1635 = vst [vmem:[%s194 + $0x88] sm:$0xff] %v1573
      %1636 = vst [vmem:[%s194 + $0xa8] sm:$0xff] %v1578
      %1637 = vst [vmem:[%s194 + $0xc8] sm:$0xff] %v1583
      %1638 = vst [vmem:[%s194 + $0xe8] sm:$0xff] %v1588
      %1639 = vst [vmem:[%s194 + $0x108] sm:$0xff] %v1593
      %1640 = vst [vmem:[%s194 + $0x128] sm:$0xff] %v1598
      %1641 = vst [vmem:[%s194 + $0x148] sm:$0xff] %v1603
      %1642 = vst [vmem:[%s194 + $0x168] sm:$0xff] %v1608
      %1643 = vst [vmem:[%s194 + $0x188] sm:$0xff] %v1613
      %1644 = vst [vmem:[%s194 + $0x1a8] sm:$0xff] %v1618
      %1645 = vst [vmem:[%s194 + $0x1c8] sm:$0xff] %v1623
      %1646 = vst [vmem:[%s194 + $0x1e8] sm:$0xff] %v1628
      %s1647 = scalar_lea.vmem [#allocation2], 96
      %v1648 = vld [vmem:[%s1647] sm:$0xff]
      %v1649 = vld [vmem:[%s1647 + $0x8] sm:$0xff]
      %v1650 = vld [vmem:[%s1647 + $0x10] sm:$0xff]
      %v1651 = vld [vmem:[%s1647 + $0x18] sm:$0xff]
      %v1652 = vld [vmem:[%s1647 + $0x20] sm:$0xff]
      %v1653 = vld [vmem:[%s1647 + $0x28] sm:$0xff]
      %v1654 = vld [vmem:[%s1647 + $0x30] sm:$0xff]
      %v1655 = vld [vmem:[%s1647 + $0x38] sm:$0xff]
      %v1656 = vld [vmem:[%s1647 + $0x60] sm:$0xff]
      %v1657 = vld [vmem:[%s1647 + $0x68] sm:$0xff]
      %v1658 = vld [vmem:[%s1647 + $0x70] sm:$0xff]
      %v1659 = vld [vmem:[%s1647 + $0x78] sm:$0xff]
      %v1660 = vld [vmem:[%s1647 + $0x80] sm:$0xff]
      %v1661 = vld [vmem:[%s1647 + $0x88] sm:$0xff]
      %v1662 = vld [vmem:[%s1647 + $0x90] sm:$0xff]
      %v1663 = vld [vmem:[%s1647 + $0x98] sm:$0xff]
      %v1664 = vld [vmem:[%s1647 + $0xc0] sm:$0xff]
      %v1665 = vld [vmem:[%s1647 + $0xc8] sm:$0xff]
      %v1666 = vld [vmem:[%s1647 + $0xd0] sm:$0xff]
      %v1667 = vld [vmem:[%s1647 + $0xd8] sm:$0xff]
      %v1668 = vld [vmem:[%s1647 + $0xe0] sm:$0xff]
      %v1669 = vld [vmem:[%s1647 + $0xe8] sm:$0xff]
      %v1670 = vld [vmem:[%s1647 + $0xf0] sm:$0xff]
      %v1671 = vld [vmem:[%s1647 + $0xf8] sm:$0xff]
      %v1672 = vld [vmem:[%s1647 + $0x120] sm:$0xff]
      %v1673 = vld [vmem:[%s1647 + $0x128] sm:$0xff]
      %v1674 = vld [vmem:[%s1647 + $0x130] sm:$0xff]
      %v1675 = vld [vmem:[%s1647 + $0x138] sm:$0xff]
      %v1676 = vld [vmem:[%s1647 + $0x140] sm:$0xff]
      %v1677 = vld [vmem:[%s1647 + $0x148] sm:$0xff]
      %v1678 = vld [vmem:[%s1647 + $0x150] sm:$0xff]
      %v1679 = vld [vmem:[%s1647 + $0x158] sm:$0xff]
      %v1680 = vld [vmem:[%s1647 + $0x180] sm:$0xff]
      %v1681 = vld [vmem:[%s1647 + $0x188] sm:$0xff]
      %v1682 = vld [vmem:[%s1647 + $0x190] sm:$0xff]
      %v1683 = vld [vmem:[%s1647 + $0x198] sm:$0xff]
      %v1684 = vld [vmem:[%s1647 + $0x1a0] sm:$0xff]
      %v1685 = vld [vmem:[%s1647 + $0x1a8] sm:$0xff]
      %v1686 = vld [vmem:[%s1647 + $0x1b0] sm:$0xff]
      %v1687 = vld [vmem:[%s1647 + $0x1b8] sm:$0xff]
      %v1688 = vld [vmem:[%s1647 + $0x1e0] sm:$0xff]
      %v1689 = vld [vmem:[%s1647 + $0x1e8] sm:$0xff]
      %v1690 = vld [vmem:[%s1647 + $0x1f0] sm:$0xff]
      %v1691 = vld [vmem:[%s1647 + $0x1f8] sm:$0xff]
      %v1692 = vld [vmem:[%s1647 + $0x200] sm:$0xff]
      %v1693 = vld [vmem:[%s1647 + $0x208] sm:$0xff]
      %v1694 = vld [vmem:[%s1647 + $0x210] sm:$0xff]
      %v1695 = vld [vmem:[%s1647 + $0x218] sm:$0xff]
      %v1696 = vld [vmem:[%s1647 + $0x240] sm:$0xff]
      %v1697 = vld [vmem:[%s1647 + $0x248] sm:$0xff]
      %v1698 = vld [vmem:[%s1647 + $0x250] sm:$0xff]
      %v1699 = vld [vmem:[%s1647 + $0x258] sm:$0xff]
      %v1700 = vld [vmem:[%s1647 + $0x260] sm:$0xff]
      %v1701 = vld [vmem:[%s1647 + $0x268] sm:$0xff]
      %v1702 = vld [vmem:[%s1647 + $0x270] sm:$0xff]
      %v1703 = vld [vmem:[%s1647 + $0x278] sm:$0xff]
      %v1704 = vld [vmem:[%s1647 + $0x2a0] sm:$0xff]
      %v1705 = vld [vmem:[%s1647 + $0x2a8] sm:$0xff]
      %v1706 = vld [vmem:[%s1647 + $0x2b0] sm:$0xff]
      %v1707 = vld [vmem:[%s1647 + $0x2b8] sm:$0xff]
      %v1708 = vld [vmem:[%s1647 + $0x2c0] sm:$0xff]
      %v1709 = vld [vmem:[%s1647 + $0x2c8] sm:$0xff]
      %v1710 = vld [vmem:[%s1647 + $0x2d0] sm:$0xff]
      %v1711 = vld [vmem:[%s1647 + $0x2d8] sm:$0xff]
      %s1712 = scalar_lea.vmem %s1, 1024
      %v1713 = vld [vmem:[%s1712] sm:$0xff]
      %v1714 = vld [vmem:[%s1712 + $0x8] sm:$0xff]
      %v1715 = vld [vmem:[%s1712 + $0x10] sm:$0xff]
      %v1716 = vld [vmem:[%s1712 + $0x18] sm:$0xff]
      %v1717 = vld [vmem:[%s1712 + $0x20] sm:$0xff]
      %v1718 = vld [vmem:[%s1712 + $0x28] sm:$0xff]
      %v1719 = vld [vmem:[%s1712 + $0x30] sm:$0xff]
      %v1720 = vld [vmem:[%s1712 + $0x38] sm:$0xff]
      %v1721 = vld [vmem:[%s1712 + $0x40] sm:$0xff]
      %v1722 = vld [vmem:[%s1712 + $0x48] sm:$0xff]
      %v1723 = vld [vmem:[%s1712 + $0x50] sm:$0xff]
      %v1724 = vld [vmem:[%s1712 + $0x58] sm:$0xff]
      %v1725 = vld [vmem:[%s1712 + $0x60] sm:$0xff]
      %v1726 = vld [vmem:[%s1712 + $0x68] sm:$0xff]
      %v1727 = vld [vmem:[%s1712 + $0x70] sm:$0xff]
      %v1728 = vld [vmem:[%s1712 + $0x78] sm:$0xff]
      %v1729 = vld [vmem:[%s1712 + $0x80] sm:$0xff]
      %v1730 = vld [vmem:[%s1712 + $0x88] sm:$0xff]
      %v1731 = vld [vmem:[%s1712 + $0x90] sm:$0xff]
      %v1732 = vld [vmem:[%s1712 + $0x98] sm:$0xff]
      %v1733 = vld [vmem:[%s1712 + $0xa0] sm:$0xff]
      %v1734 = vld [vmem:[%s1712 + $0xa8] sm:$0xff]
      %v1735 = vld [vmem:[%s1712 + $0xb0] sm:$0xff]
      %v1736 = vld [vmem:[%s1712 + $0xb8] sm:$0xff]
      %v1737 = vld [vmem:[%s1712 + $0xc0] sm:$0xff]
      %v1738 = vld [vmem:[%s1712 + $0xc8] sm:$0xff]
      %v1739 = vld [vmem:[%s1712 + $0xd0] sm:$0xff]
      %v1740 = vld [vmem:[%s1712 + $0xd8] sm:$0xff]
      %v1741 = vld [vmem:[%s1712 + $0xe0] sm:$0xff]
      %v1742 = vld [vmem:[%s1712 + $0xe8] sm:$0xff]
      %v1743 = vld [vmem:[%s1712 + $0xf0] sm:$0xff]
      %v1744 = vld [vmem:[%s1712 + $0xf8] sm:$0xff]
      %v1745 = vld [vmem:[%s1712 + $0x100] sm:$0xff]
      %v1746 = vld [vmem:[%s1712 + $0x108] sm:$0xff]
      %v1747 = vld [vmem:[%s1712 + $0x110] sm:$0xff]
      %v1748 = vld [vmem:[%s1712 + $0x118] sm:$0xff]
      %v1749 = vld [vmem:[%s1712 + $0x120] sm:$0xff]
      %v1750 = vld [vmem:[%s1712 + $0x128] sm:$0xff]
      %v1751 = vld [vmem:[%s1712 + $0x130] sm:$0xff]
      %v1752 = vld [vmem:[%s1712 + $0x138] sm:$0xff]
      %v1753 = vld [vmem:[%s1712 + $0x140] sm:$0xff]
      %v1754 = vld [vmem:[%s1712 + $0x148] sm:$0xff]
      %v1755 = vld [vmem:[%s1712 + $0x150] sm:$0xff]
      %v1756 = vld [vmem:[%s1712 + $0x158] sm:$0xff]
      %v1757 = vld [vmem:[%s1712 + $0x160] sm:$0xff]
      %v1758 = vld [vmem:[%s1712 + $0x168] sm:$0xff]
      %v1759 = vld [vmem:[%s1712 + $0x170] sm:$0xff]
      %v1760 = vld [vmem:[%s1712 + $0x178] sm:$0xff]
      %v1761 = vld [vmem:[%s1712 + $0x180] sm:$0xff]
      %v1762 = vld [vmem:[%s1712 + $0x188] sm:$0xff]
      %v1763 = vld [vmem:[%s1712 + $0x190] sm:$0xff]
      %v1764 = vld [vmem:[%s1712 + $0x198] sm:$0xff]
      %v1765 = vld [vmem:[%s1712 + $0x1a0] sm:$0xff]
      %v1766 = vld [vmem:[%s1712 + $0x1a8] sm:$0xff]
      %v1767 = vld [vmem:[%s1712 + $0x1b0] sm:$0xff]
      %v1768 = vld [vmem:[%s1712 + $0x1b8] sm:$0xff]
      %v1769 = vld [vmem:[%s1712 + $0x1c0] sm:$0xff]
      %v1770 = vld [vmem:[%s1712 + $0x1c8] sm:$0xff]
      %v1771 = vld [vmem:[%s1712 + $0x1d0] sm:$0xff]
      %v1772 = vld [vmem:[%s1712 + $0x1d8] sm:$0xff]
      %v1773 = vld [vmem:[%s1712 + $0x1e0] sm:$0xff]
      %v1774 = vld [vmem:[%s1712 + $0x1e8] sm:$0xff]
      %v1775 = vld [vmem:[%s1712 + $0x1f0] sm:$0xff]
      %v1776 = vld [vmem:[%s1712 + $0x1f8] sm:$0xff]
      %1777 = vmatprep.subr.mxu0 0.0
      %1778 = vmatpush1.msra.mxu0 %v1728
      %1779 = vmatprep.subr.mxu0 0.0
      %1780 = vmatpush1.msra.mxu0 %v1727
      %1781 = vmatprep.subr.mxu0 0.0
      %1782 = vmatpush1.msra.mxu0 %v1726
      %1783 = vmatprep.subr.mxu0 0.0
      %1784 = vmatpush1.msra.mxu0 %v1725
      %1785 = vmatprep.subr.mxu0 0.0
      %1786 = vmatpush1.msra.mxu0 %v1724
      %1787 = vmatprep.subr.mxu0 0.0
      %1788 = vmatpush1.msra.mxu0 %v1723
      %1789 = vmatprep.subr.mxu0 0.0
      %1790 = vmatpush1.msra.mxu0 %v1722
      %1791 = vmatprep.subr.mxu0 0.0
      %1792 = vmatpush1.msra.mxu0 %v1721
      %1793 = vmatprep.subr.mxu0 0.0
      %1794 = vmatpush1.msra.mxu0 %v1720
      %1795 = vmatprep.subr.mxu0 0.0
      %1796 = vmatpush1.msra.mxu0 %v1719
      %1797 = vmatprep.subr.mxu0 0.0
      %1798 = vmatpush1.msra.mxu0 %v1718
      %1799 = vmatprep.subr.mxu0 0.0
      %1800 = vmatpush1.msra.mxu0 %v1717
      %1801 = vmatprep.subr.mxu0 0.0
      %1802 = vmatpush1.msra.mxu0 %v1716
      %1803 = vmatprep.subr.mxu0 0.0
      %1804 = vmatpush1.msra.mxu0 %v1715
      %1805 = vmatprep.subr.mxu0 0.0
      %1806 = vmatpush1.msra.mxu0 %v1714
      %1807 = vmatprep.subr.mxu0 0.0
      %1808 = vmatpush1.msra.mxu0 %v1713
      %1809 = vmatprep.subr.mxu0 0.0
      %1810 = vmatpush2.msra.mxu0 %v1744
      %1811 = vmatprep.subr.mxu0 0.0
      %1812 = vmatpush2.msra.mxu0 %v1743
      %1813 = vmatprep.subr.mxu0 0.0
      %1814 = vmatpush2.msra.mxu0 %v1742
      %1815 = vmatprep.subr.mxu0 0.0
      %1816 = vmatpush2.msra.mxu0 %v1741
      %1817 = vmatprep.subr.mxu0 0.0
      %1818 = vmatpush2.msra.mxu0 %v1740
      %1819 = vmatprep.subr.mxu0 0.0
      %1820 = vmatpush2.msra.mxu0 %v1739
      %1821 = vmatprep.subr.mxu0 0.0
      %1822 = vmatpush2.msra.mxu0 %v1738
      %1823 = vmatprep.subr.mxu0 0.0
      %1824 = vmatpush2.msra.mxu0 %v1737
      %1825 = vmatprep.subr.mxu0 0.0
      %1826 = vmatpush2.msra.mxu0 %v1736
      %1827 = vmatprep.subr.mxu0 0.0
      %1828 = vmatpush2.msra.mxu0 %v1735
      %1829 = vmatprep.subr.mxu0 0.0
      %1830 = vmatpush2.msra.mxu0 %v1734
      %1831 = vmatprep.subr.mxu0 0.0
      %1832 = vmatpush2.msra.mxu0 %v1733
      %1833 = vmatprep.subr.mxu0 0.0
      %1834 = vmatpush2.msra.mxu0 %v1732
      %1835 = vmatprep.subr.mxu0 0.0
      %1836 = vmatpush2.msra.mxu0 %v1731
      %1837 = vmatprep.subr.mxu0 0.0
      %1838 = vmatpush2.msra.mxu0 %v1730
      %1839 = vmatprep.subr.mxu0 0.0
      %1840 = vmatpush2.msra.mxu0 %v1729
      %1841 = vmatprep.mubr.f32.mxu0 %v1649
      %1842 = vmatmul.mubr.f32.gmra.mxu0 %v1648
      %v1843 = vpop.f32.mrf.mxu0
      %v1844 = vadd.f32 %v551, %v1843
      %v1845 = vpop.f32.mrf.mxu0
      %1846 = vmatprep.mubr.f32.mxu0 %v1653
      %1847 = vmatmul.mubr.f32.gmra.mxu0 %v1652
      %v1848 = vpop.f32.mrf.mxu0
      %v1849 = vadd.f32 %v551, %v1848
      %v1850 = vpop.f32.mrf.mxu0
      %1851 = vmatprep.mubr.f32.mxu0 %v1657
      %1852 = vmatmul.mubr.f32.gmra.mxu0 %v1656
      %v1853 = vpop.f32.mrf.mxu0
      %v1854 = vadd.f32 %v551, %v1853
      %v1855 = vpop.f32.mrf.mxu0
      %1856 = vmatprep.mubr.f32.mxu0 %v1661
      %1857 = vmatmul.mubr.f32.gmra.mxu0 %v1660
      %v1858 = vpop.f32.mrf.mxu0
      %v1859 = vadd.f32 %v551, %v1858
      %v1860 = vpop.f32.mrf.mxu0
      %1861 = vmatprep.mubr.f32.mxu0 %v1665
      %1862 = vmatmul.mubr.f32.gmra.mxu0 %v1664
      %v1863 = vpop.f32.mrf.mxu0
      %v1864 = vadd.f32 %v551, %v1863
      %v1865 = vpop.f32.mrf.mxu0
      %1866 = vmatprep.mubr.f32.mxu0 %v1669
      %1867 = vmatmul.mubr.f32.gmra.mxu0 %v1668
      %v1868 = vpop.f32.mrf.mxu0
      %v1869 = vadd.f32 %v551, %v1868
      %v1870 = vpop.f32.mrf.mxu0
      %1871 = vmatprep.mubr.f32.mxu0 %v1673
      %1872 = vmatmul.mubr.f32.gmra.mxu0 %v1672
      %v1873 = vpop.f32.mrf.mxu0
      %v1874 = vadd.f32 %v551, %v1873
      %v1875 = vpop.f32.mrf.mxu0
      %1876 = vmatprep.mubr.f32.mxu0 %v1677
      %1877 = vmatmul.mubr.f32.gmra.mxu0 %v1676
      %v1878 = vpop.f32.mrf.mxu0
      %v1879 = vadd.f32 %v551, %v1878
      %v1880 = vpop.f32.mrf.mxu0
      %1881 = vmatprep.mubr.f32.mxu0 %v1681
      %1882 = vmatmul.mubr.f32.gmra.mxu0 %v1680
      %v1883 = vpop.f32.mrf.mxu0
      %v1884 = vadd.f32 %v551, %v1883
      %v1885 = vpop.f32.mrf.mxu0
      %1886 = vmatprep.mubr.f32.mxu0 %v1685
      %1887 = vmatmul.mubr.f32.gmra.mxu0 %v1684
      %v1888 = vpop.f32.mrf.mxu0
      %v1889 = vadd.f32 %v551, %v1888
      %v1890 = vpop.f32.mrf.mxu0
      %1891 = vmatprep.mubr.f32.mxu0 %v1689
      %1892 = vmatmul.mubr.f32.gmra.mxu0 %v1688
      %v1893 = vpop.f32.mrf.mxu0
      %v1894 = vadd.f32 %v551, %v1893
      %v1895 = vpop.f32.mrf.mxu0
      %1896 = vmatprep.mubr.f32.mxu0 %v1693
      %1897 = vmatmul.mubr.f32.gmra.mxu0 %v1692
      %v1898 = vpop.f32.mrf.mxu0
      %v1899 = vadd.f32 %v551, %v1898
      %v1900 = vpop.f32.mrf.mxu0
      %1901 = vmatprep.mubr.f32.mxu0 %v1697
      %1902 = vmatmul.mubr.f32.gmra.mxu0 %v1696
      %v1903 = vpop.f32.mrf.mxu0
      %v1904 = vadd.f32 %v551, %v1903
      %v1905 = vpop.f32.mrf.mxu0
      %1906 = vmatprep.mubr.f32.mxu0 %v1701
      %1907 = vmatmul.mubr.f32.gmra.mxu0 %v1700
      %v1908 = vpop.f32.mrf.mxu0
      %v1909 = vadd.f32 %v551, %v1908
      %v1910 = vpop.f32.mrf.mxu0
      %1911 = vmatprep.mubr.f32.mxu0 %v1705
      %1912 = vmatmul.mubr.f32.gmra.mxu0 %v1704
      %v1913 = vpop.f32.mrf.mxu0
      %v1914 = vadd.f32 %v551, %v1913
      %v1915 = vpop.f32.mrf.mxu0
      %1916 = vmatprep.mubr.f32.mxu0 %v1709
      %1917 = vmatmul.mubr.f32.gmra.mxu0 %v1708
      %v1918 = vpop.f32.mrf.mxu0
      %v1919 = vadd.f32 %v551, %v1918
      %v1920 = vpop.f32.mrf.mxu0
      %1921 = vdwg.mxu0
      %1922 = vmatprep.subr.mxu0 0.0
      %1923 = vmatpush1.msra.mxu0 %v1760
      %1924 = vmatprep.subr.mxu0 0.0
      %1925 = vmatpush1.msra.mxu0 %v1759
      %1926 = vmatprep.subr.mxu0 0.0
      %1927 = vmatpush1.msra.mxu0 %v1758
      %1928 = vmatprep.subr.mxu0 0.0
      %1929 = vmatpush1.msra.mxu0 %v1757
      %1930 = vmatprep.subr.mxu0 0.0
      %1931 = vmatpush1.msra.mxu0 %v1756
      %1932 = vmatprep.subr.mxu0 0.0
      %1933 = vmatpush1.msra.mxu0 %v1755
      %1934 = vmatprep.subr.mxu0 0.0
      %1935 = vmatpush1.msra.mxu0 %v1754
      %1936 = vmatprep.subr.mxu0 0.0
      %1937 = vmatpush1.msra.mxu0 %v1753
      %1938 = vmatprep.subr.mxu0 0.0
      %1939 = vmatpush1.msra.mxu0 %v1752
      %1940 = vmatprep.subr.mxu0 0.0
      %1941 = vmatpush1.msra.mxu0 %v1751
      %1942 = vmatprep.subr.mxu0 0.0
      %1943 = vmatpush1.msra.mxu0 %v1750
      %1944 = vmatprep.subr.mxu0 0.0
      %1945 = vmatpush1.msra.mxu0 %v1749
      %1946 = vmatprep.subr.mxu0 0.0
      %1947 = vmatpush1.msra.mxu0 %v1748
      %1948 = vmatprep.subr.mxu0 0.0
      %1949 = vmatpush1.msra.mxu0 %v1747
      %1950 = vmatprep.subr.mxu0 0.0
      %1951 = vmatpush1.msra.mxu0 %v1746
      %1952 = vmatprep.subr.mxu0 0.0
      %1953 = vmatpush1.msra.mxu0 %v1745
      %1954 = vmatprep.subr.mxu0 0.0
      %1955 = vmatpush2.msra.mxu0 %v1776
      %1956 = vmatprep.subr.mxu0 0.0
      %1957 = vmatpush2.msra.mxu0 %v1775
      %1958 = vmatprep.subr.mxu0 0.0
      %1959 = vmatpush2.msra.mxu0 %v1774
      %1960 = vmatprep.subr.mxu0 0.0
      %1961 = vmatpush2.msra.mxu0 %v1773
      %1962 = vmatprep.subr.mxu0 0.0
      %1963 = vmatpush2.msra.mxu0 %v1772
      %1964 = vmatprep.subr.mxu0 0.0
      %1965 = vmatpush2.msra.mxu0 %v1771
      %1966 = vmatprep.subr.mxu0 0.0
      %1967 = vmatpush2.msra.mxu0 %v1770
      %1968 = vmatprep.subr.mxu0 0.0
      %1969 = vmatpush2.msra.mxu0 %v1769
      %1970 = vmatprep.subr.mxu0 0.0
      %1971 = vmatpush2.msra.mxu0 %v1768
      %1972 = vmatprep.subr.mxu0 0.0
      %1973 = vmatpush2.msra.mxu0 %v1767
      %1974 = vmatprep.subr.mxu0 0.0
      %1975 = vmatpush2.msra.mxu0 %v1766
      %1976 = vmatprep.subr.mxu0 0.0
      %1977 = vmatpush2.msra.mxu0 %v1765
      %1978 = vmatprep.subr.mxu0 0.0
      %1979 = vmatpush2.msra.mxu0 %v1764
      %1980 = vmatprep.subr.mxu0 0.0
      %1981 = vmatpush2.msra.mxu0 %v1763
      %1982 = vmatprep.subr.mxu0 0.0
      %1983 = vmatpush2.msra.mxu0 %v1762
      %1984 = vmatprep.subr.mxu0 0.0
      %1985 = vmatpush2.msra.mxu0 %v1761
      %1986 = vmatprep.mubr.f32.mxu0 %v1651
      %1987 = vmatmul.mubr.f32.gmra.mxu0 %v1650
      %v1988 = vpop.f32.mrf.mxu0
      %v1989 = vadd.f32 %v1844, %v1988
      %v1990 = vpop.f32.mrf.mxu0
      %1991 = vmatprep.mubr.f32.mxu0 %v1655
      %1992 = vmatmul.mubr.f32.gmra.mxu0 %v1654
      %v1993 = vpop.f32.mrf.mxu0
      %v1994 = vadd.f32 %v1849, %v1993
      %v1995 = vpop.f32.mrf.mxu0
      %1996 = vmatprep.mubr.f32.mxu0 %v1659
      %1997 = vmatmul.mubr.f32.gmra.mxu0 %v1658
      %v1998 = vpop.f32.mrf.mxu0
      %v1999 = vadd.f32 %v1854, %v1998
      %v2000 = vpop.f32.mrf.mxu0
      %2001 = vmatprep.mubr.f32.mxu0 %v1663
      %2002 = vmatmul.mubr.f32.gmra.mxu0 %v1662
      %v2003 = vpop.f32.mrf.mxu0
      %v2004 = vadd.f32 %v1859, %v2003
      %v2005 = vpop.f32.mrf.mxu0
      %2006 = vmatprep.mubr.f32.mxu0 %v1667
      %2007 = vmatmul.mubr.f32.gmra.mxu0 %v1666
      %v2008 = vpop.f32.mrf.mxu0
      %v2009 = vadd.f32 %v1864, %v2008
      %v2010 = vpop.f32.mrf.mxu0
      %2011 = vmatprep.mubr.f32.mxu0 %v1671
      %2012 = vmatmul.mubr.f32.gmra.mxu0 %v1670
      %v2013 = vpop.f32.mrf.mxu0
      %v2014 = vadd.f32 %v1869, %v2013
      %v2015 = vpop.f32.mrf.mxu0
      %2016 = vmatprep.mubr.f32.mxu0 %v1675
      %2017 = vmatmul.mubr.f32.gmra.mxu0 %v1674
      %v2018 = vpop.f32.mrf.mxu0
      %v2019 = vadd.f32 %v1874, %v2018
      %v2020 = vpop.f32.mrf.mxu0
      %2021 = vmatprep.mubr.f32.mxu0 %v1679
      %2022 = vmatmul.mubr.f32.gmra.mxu0 %v1678
      %v2023 = vpop.f32.mrf.mxu0
      %v2024 = vadd.f32 %v1879, %v2023
      %v2025 = vpop.f32.mrf.mxu0
      %2026 = vmatprep.mubr.f32.mxu0 %v1683
      %2027 = vmatmul.mubr.f32.gmra.mxu0 %v1682
      %v2028 = vpop.f32.mrf.mxu0
      %v2029 = vadd.f32 %v1884, %v2028
      %v2030 = vpop.f32.mrf.mxu0
      %2031 = vmatprep.mubr.f32.mxu0 %v1687
      %2032 = vmatmul.mubr.f32.gmra.mxu0 %v1686
      %v2033 = vpop.f32.mrf.mxu0
      %v2034 = vadd.f32 %v1889, %v2033
      %v2035 = vpop.f32.mrf.mxu0
      %2036 = vmatprep.mubr.f32.mxu0 %v1691
      %2037 = vmatmul.mubr.f32.gmra.mxu0 %v1690
      %v2038 = vpop.f32.mrf.mxu0
      %v2039 = vadd.f32 %v1894, %v2038
      %v2040 = vpop.f32.mrf.mxu0
      %2041 = vmatprep.mubr.f32.mxu0 %v1695
      %2042 = vmatmul.mubr.f32.gmra.mxu0 %v1694
      %v2043 = vpop.f32.mrf.mxu0
      %v2044 = vadd.f32 %v1899, %v2043
      %v2045 = vpop.f32.mrf.mxu0
      %2046 = vmatprep.mubr.f32.mxu0 %v1699
      %2047 = vmatmul.mubr.f32.gmra.mxu0 %v1698
      %v2048 = vpop.f32.mrf.mxu0
      %v2049 = vadd.f32 %v1904, %v2048
      %v2050 = vpop.f32.mrf.mxu0
      %2051 = vmatprep.mubr.f32.mxu0 %v1703
      %2052 = vmatmul.mubr.f32.gmra.mxu0 %v1702
      %v2053 = vpop.f32.mrf.mxu0
      %v2054 = vadd.f32 %v1909, %v2053
      %v2055 = vpop.f32.mrf.mxu0
      %2056 = vmatprep.mubr.f32.mxu0 %v1707
      %2057 = vmatmul.mubr.f32.gmra.mxu0 %v1706
      %v2058 = vpop.f32.mrf.mxu0
      %v2059 = vadd.f32 %v1914, %v2058
      %v2060 = vpop.f32.mrf.mxu0
      %2061 = vmatprep.mubr.f32.mxu0 %v1711
      %2062 = vmatmul.mubr.f32.gmra.mxu0 %v1710
      %v2063 = vpop.f32.mrf.mxu0
      %v2064 = vadd.f32 %v1919, %v2063
      %v2065 = vpop.f32.mrf.mxu0
      %2066 = vdwg.mxu0
      %2067 = vst [vmem:[%s194 + $0x10] sm:$0xff] %v1989
      %2068 = vst [vmem:[%s194 + $0x30] sm:$0xff] %v1994
      %2069 = vst [vmem:[%s194 + $0x50] sm:$0xff] %v1999
      %2070 = vst [vmem:[%s194 + $0x70] sm:$0xff] %v2004
      %2071 = vst [vmem:[%s194 + $0x90] sm:$0xff] %v2009
      %2072 = vst [vmem:[%s194 + $0xb0] sm:$0xff] %v2014
      %2073 = vst [vmem:[%s194 + $0xd0] sm:$0xff] %v2019
      %2074 = vst [vmem:[%s194 + $0xf0] sm:$0xff] %v2024
      %2075 = vst [vmem:[%s194 + $0x110] sm:$0xff] %v2029
      %2076 = vst [vmem:[%s194 + $0x130] sm:$0xff] %v2034
      %2077 = vst [vmem:[%s194 + $0x150] sm:$0xff] %v2039
      %2078 = vst [vmem:[%s194 + $0x170] sm:$0xff] %v2044
      %2079 = vst [vmem:[%s194 + $0x190] sm:$0xff] %v2049
      %2080 = vst [vmem:[%s194 + $0x1b0] sm:$0xff] %v2054
      %2081 = vst [vmem:[%s194 + $0x1d0] sm:$0xff] %v2059
      %2082 = vst [vmem:[%s194 + $0x1f0] sm:$0xff] %v2064
      %v2083 = vld [vmem:[%s1647] sm:$0xfe]
      %v2084 = vld [vmem:[%s1647 + $0x8] sm:$0xfe]
      %v2085 = vld [vmem:[%s1647 + $0x10] sm:$0xfe]
      %v2086 = vld [vmem:[%s1647 + $0x18] sm:$0xfe]
      %v2087 = vld [vmem:[%s1647 + $0x20] sm:$0xff]
      %v2088 = vld [vmem:[%s1647 + $0x28] sm:$0xff]
      %v2089 = vld [vmem:[%s1647 + $0x30] sm:$0xff]
      %v2090 = vld [vmem:[%s1647 + $0x38] sm:$0xff]
      %v2091 = vld [vmem:[%s1647 + $0x40] sm:$0x1]
      %v2092 = vld [vmem:[%s1647 + $0x48] sm:$0x1]
      %v2093 = vld [vmem:[%s1647 + $0x50] sm:$0x1]
      %v2094 = vld [vmem:[%s1647 + $0x58] sm:$0x1]
      %v2095 = vld [vmem:[%s1647 + $0x60] sm:$0xfe]
      %v2096 = vld [vmem:[%s1647 + $0x68] sm:$0xfe]
      %v2097 = vld [vmem:[%s1647 + $0x70] sm:$0xfe]
      %v2098 = vld [vmem:[%s1647 + $0x78] sm:$0xfe]
      %v2099 = vld [vmem:[%s1647 + $0x80] sm:$0xff]
      %v2100 = vld [vmem:[%s1647 + $0x88] sm:$0xff]
      %v2101 = vld [vmem:[%s1647 + $0x90] sm:$0xff]
      %v2102 = vld [vmem:[%s1647 + $0x98] sm:$0xff]
      %v2103 = vld [vmem:[%s1647 + $0xa0] sm:$0x1]
      %v2104 = vld [vmem:[%s1647 + $0xa8] sm:$0x1]
      %v2105 = vld [vmem:[%s1647 + $0xb0] sm:$0x1]
      %v2106 = vld [vmem:[%s1647 + $0xb8] sm:$0x1]
      %v2107 = vld [vmem:[%s1647 + $0xc0] sm:$0xfe]
      %v2108 = vld [vmem:[%s1647 + $0xc8] sm:$0xfe]
      %v2109 = vld [vmem:[%s1647 + $0xd0] sm:$0xfe]
      %v2110 = vld [vmem:[%s1647 + $0xd8] sm:$0xfe]
      %v2111 = vld [vmem:[%s1647 + $0xe0] sm:$0xff]
      %v2112 = vld [vmem:[%s1647 + $0xe8] sm:$0xff]
      %v2113 = vld [vmem:[%s1647 + $0xf0] sm:$0xff]
      %v2114 = vld [vmem:[%s1647 + $0xf8] sm:$0xff]
      %v2115 = vld [vmem:[%s1647 + $0x100] sm:$0x1]
      %v2116 = vld [vmem:[%s1647 + $0x108] sm:$0x1]
      %v2117 = vld [vmem:[%s1647 + $0x110] sm:$0x1]
      %v2118 = vld [vmem:[%s1647 + $0x118] sm:$0x1]
      %v2119 = vld [vmem:[%s1647 + $0x120] sm:$0xfe]
      %v2120 = vld [vmem:[%s1647 + $0x128] sm:$0xfe]
      %v2121 = vld [vmem:[%s1647 + $0x130] sm:$0xfe]
      %v2122 = vld [vmem:[%s1647 + $0x138] sm:$0xfe]
      %v2123 = vld [vmem:[%s1647 + $0x140] sm:$0xff]
      %v2124 = vld [vmem:[%s1647 + $0x148] sm:$0xff]
      %v2125 = vld [vmem:[%s1647 + $0x150] sm:$0xff]
      %v2126 = vld [vmem:[%s1647 + $0x158] sm:$0xff]
      %v2127 = vld [vmem:[%s1647 + $0x160] sm:$0x1]
      %v2128 = vld [vmem:[%s1647 + $0x168] sm:$0x1]
      %v2129 = vld [vmem:[%s1647 + $0x170] sm:$0x1]
      %v2130 = vld [vmem:[%s1647 + $0x178] sm:$0x1]
      %v2131 = vld [vmem:[%s1647 + $0x180] sm:$0xfe]
      %v2132 = vld [vmem:[%s1647 + $0x188] sm:$0xfe]
      %v2133 = vld [vmem:[%s1647 + $0x190] sm:$0xfe]
      %v2134 = vld [vmem:[%s1647 + $0x198] sm:$0xfe]
      %v2135 = vld [vmem:[%s1647 + $0x1a0] sm:$0xff]
      %v2136 = vld [vmem:[%s1647 + $0x1a8] sm:$0xff]
      %v2137 = vld [vmem:[%s1647 + $0x1b0] sm:$0xff]
      %v2138 = vld [vmem:[%s1647 + $0x1b8] sm:$0xff]
      %v2139 = vld [vmem:[%s1647 + $0x1c0] sm:$0x1]
      %v2140 = vld [vmem:[%s1647 + $0x1c8] sm:$0x1]
      %v2141 = vld [vmem:[%s1647 + $0x1d0] sm:$0x1]
      %v2142 = vld [vmem:[%s1647 + $0x1d8] sm:$0x1]
      %v2143 = vld [vmem:[%s1647 + $0x1e0] sm:$0xfe]
      %v2144 = vld [vmem:[%s1647 + $0x1e8] sm:$0xfe]
      %v2145 = vld [vmem:[%s1647 + $0x1f0] sm:$0xfe]
      %v2146 = vld [vmem:[%s1647 + $0x1f8] sm:$0xfe]
      %v2147 = vld [vmem:[%s1647 + $0x200] sm:$0xff]
      %v2148 = vld [vmem:[%s1647 + $0x208] sm:$0xff]
      %v2149 = vld [vmem:[%s1647 + $0x210] sm:$0xff]
      %v2150 = vld [vmem:[%s1647 + $0x218] sm:$0xff]
      %v2151 = vld [vmem:[%s1647 + $0x220] sm:$0x1]
      %v2152 = vld [vmem:[%s1647 + $0x228] sm:$0x1]
      %v2153 = vld [vmem:[%s1647 + $0x230] sm:$0x1]
      %v2154 = vld [vmem:[%s1647 + $0x238] sm:$0x1]
      %v2155 = vld [vmem:[%s1647 + $0x240] sm:$0xfe]
      %v2156 = vld [vmem:[%s1647 + $0x248] sm:$0xfe]
      %v2157 = vld [vmem:[%s1647 + $0x250] sm:$0xfe]
      %v2158 = vld [vmem:[%s1647 + $0x258] sm:$0xfe]
      %v2159 = vld [vmem:[%s1647 + $0x260] sm:$0xff]
      %v2160 = vld [vmem:[%s1647 + $0x268] sm:$0xff]
      %v2161 = vld [vmem:[%s1647 + $0x270] sm:$0xff]
      %v2162 = vld [vmem:[%s1647 + $0x278] sm:$0xff]
      %v2163 = vld [vmem:[%s1647 + $0x280] sm:$0x1]
      %v2164 = vld [vmem:[%s1647 + $0x288] sm:$0x1]
      %v2165 = vld [vmem:[%s1647 + $0x290] sm:$0x1]
      %v2166 = vld [vmem:[%s1647 + $0x298] sm:$0x1]
      %v2167 = vld [vmem:[%s1647 + $0x2a0] sm:$0xfe]
      %v2168 = vld [vmem:[%s1647 + $0x2a8] sm:$0xfe]
      %v2169 = vld [vmem:[%s1647 + $0x2b0] sm:$0xfe]
      %v2170 = vld [vmem:[%s1647 + $0x2b8] sm:$0xfe]
      %v2171 = vld [vmem:[%s1647 + $0x2c0] sm:$0xff]
      %v2172 = vld [vmem:[%s1647 + $0x2c8] sm:$0xff]
      %v2173 = vld [vmem:[%s1647 + $0x2d0] sm:$0xff]
      %v2174 = vld [vmem:[%s1647 + $0x2d8] sm:$0xff]
      %v2175 = vld [vmem:[%s1647 + $0x2e0] sm:$0x1]
      %v2176 = vld [vmem:[%s1647 + $0x2e8] sm:$0x1]
      %v2177 = vld [vmem:[%s1647 + $0x2f0] sm:$0x1]
      %v2178 = vld [vmem:[%s1647 + $0x2f8] sm:$0x1]
      %v2275 = vrot.slane %v2083, 1
      %v2276 = vrot.slane %v2087, 1
      %v2277 = vsel %vm1051, %v2275, %v2276
      %v2278 = vrot.slane %v2084, 1
      %v2279 = vrot.slane %v2088, 1
      %v2280 = vsel %vm1051, %v2278, %v2279
      %v2281 = vrot.slane %v2085, 1
      %v2282 = vrot.slane %v2089, 1
      %v2283 = vsel %vm1051, %v2281, %v2282
      %v2284 = vrot.slane %v2086, 1
      %v2285 = vrot.slane %v2090, 1
      %v2286 = vsel %vm1051, %v2284, %v2285
      %v2287 = vrot.slane %v2091, 1
      %v2288 = vsel %vm1051, %v2276, %v2287
      %v2289 = vrot.slane %v2092, 1
      %v2290 = vsel %vm1051, %v2279, %v2289
      %v2291 = vrot.slane %v2093, 1
      %v2292 = vsel %vm1051, %v2282, %v2291
      %v2293 = vrot.slane %v2094, 1
      %v2294 = vsel %vm1051, %v2285, %v2293
      %v2295 = vrot.slane %v2095, 1
      %v2296 = vrot.slane %v2099, 1
      %v2297 = vsel %vm1051, %v2295, %v2296
      %v2298 = vrot.slane %v2096, 1
      %v2299 = vrot.slane %v2100, 1
      %v2300 = vsel %vm1051, %v2298, %v2299
      %v2301 = vrot.slane %v2097, 1
      %v2302 = vrot.slane %v2101, 1
      %v2303 = vsel %vm1051, %v2301, %v2302
      %v2304 = vrot.slane %v2098, 1
      %v2305 = vrot.slane %v2102, 1
      %v2306 = vsel %vm1051, %v2304, %v2305
      %v2307 = vrot.slane %v2103, 1
      %v2308 = vsel %vm1051, %v2296, %v2307
      %v2309 = vrot.slane %v2104, 1
      %v2310 = vsel %vm1051, %v2299, %v2309
      %v2311 = vrot.slane %v2105, 1
      %v2312 = vsel %vm1051, %v2302, %v2311
      %v2313 = vrot.slane %v2106, 1
      %v2314 = vsel %vm1051, %v2305, %v2313
      %v2315 = vrot.slane %v2107, 1
      %v2316 = vrot.slane %v2111, 1
      %v2317 = vsel %vm1051, %v2315, %v2316
      %v2318 = vrot.slane %v2108, 1
      %v2319 = vrot.slane %v2112, 1
      %v2320 = vsel %vm1051, %v2318, %v2319
      %v2321 = vrot.slane %v2109, 1
      %v2322 = vrot.slane %v2113, 1
      %v2323 = vsel %vm1051, %v2321, %v2322
      %v2324 = vrot.slane %v2110, 1
      %v2325 = vrot.slane %v2114, 1
      %v2326 = vsel %vm1051, %v2324, %v2325
      %v2327 = vrot.slane %v2115, 1
      %v2328 = vsel %vm1051, %v2316, %v2327
      %v2329 = vrot.slane %v2116, 1
      %v2330 = vsel %vm1051, %v2319, %v2329
      %v2331 = vrot.slane %v2117, 1
      %v2332 = vsel %vm1051, %v2322, %v2331
      %v2333 = vrot.slane %v2118, 1
      %v2334 = vsel %vm1051, %v2325, %v2333
      %v2335 = vrot.slane %v2119, 1
      %v2336 = vrot.slane %v2123, 1
      %v2337 = vsel %vm1051, %v2335, %v2336
      %v2338 = vrot.slane %v2120, 1
      %v2339 = vrot.slane %v2124, 1
      %v2340 = vsel %vm1051, %v2338, %v2339
      %v2341 = vrot.slane %v2121, 1
      %v2342 = vrot.slane %v2125, 1
      %v2343 = vsel %vm1051, %v2341, %v2342
      %v2344 = vrot.slane %v2122, 1
      %v2345 = vrot.slane %v2126, 1
      %v2346 = vsel %vm1051, %v2344, %v2345
      %v2347 = vrot.slane %v2127, 1
      %v2348 = vsel %vm1051, %v2336, %v2347
      %v2349 = vrot.slane %v2128, 1
      %v2350 = vsel %vm1051, %v2339, %v2349
      %v2351 = vrot.slane %v2129, 1
      %v2352 = vsel %vm1051, %v2342, %v2351
      %v2353 = vrot.slane %v2130, 1
      %v2354 = vsel %vm1051, %v2345, %v2353
      %v2355 = vrot.slane %v2131, 1
      %v2356 = vrot.slane %v2135, 1
      %v2357 = vsel %vm1051, %v2355, %v2356
      %v2358 = vrot.slane %v2132, 1
      %v2359 = vrot.slane %v2136, 1
      %v2360 = vsel %vm1051, %v2358, %v2359
      %v2361 = vrot.slane %v2133, 1
      %v2362 = vrot.slane %v2137, 1
      %v2363 = vsel %vm1051, %v2361, %v2362
      %v2364 = vrot.slane %v2134, 1
      %v2365 = vrot.slane %v2138, 1
      %v2366 = vsel %vm1051, %v2364, %v2365
      %v2367 = vrot.slane %v2139, 1
      %v2368 = vsel %vm1051, %v2356, %v2367
      %v2369 = vrot.slane %v2140, 1
      %v2370 = vsel %vm1051, %v2359, %v2369
      %v2371 = vrot.slane %v2141, 1
      %v2372 = vsel %vm1051, %v2362, %v2371
      %v2373 = vrot.slane %v2142, 1
      %v2374 = vsel %vm1051, %v2365, %v2373
      %v2375 = vrot.slane %v2143, 1
      %v2376 = vrot.slane %v2147, 1
      %v2377 = vsel %vm1051, %v2375, %v2376
      %v2378 = vrot.slane %v2144, 1
      %v2379 = vrot.slane %v2148, 1
      %v2380 = vsel %vm1051, %v2378, %v2379
      %v2381 = vrot.slane %v2145, 1
      %v2382 = vrot.slane %v2149, 1
      %v2383 = vsel %vm1051, %v2381, %v2382
      %v2384 = vrot.slane %v2146, 1
      %v2385 = vrot.slane %v2150, 1
      %v2386 = vsel %vm1051, %v2384, %v2385
      %v2387 = vrot.slane %v2151, 1
      %v2388 = vsel %vm1051, %v2376, %v2387
      %v2389 = vrot.slane %v2152, 1
      %v2390 = vsel %vm1051, %v2379, %v2389
      %v2391 = vrot.slane %v2153, 1
      %v2392 = vsel %vm1051, %v2382, %v2391
      %v2393 = vrot.slane %v2154, 1
      %v2394 = vsel %vm1051, %v2385, %v2393
      %v2395 = vrot.slane %v2155, 1
      %v2396 = vrot.slane %v2159, 1
      %v2397 = vsel %vm1051, %v2395, %v2396
      %v2398 = vrot.slane %v2156, 1
      %v2399 = vrot.slane %v2160, 1
      %v2400 = vsel %vm1051, %v2398, %v2399
      %v2401 = vrot.slane %v2157, 1
      %v2402 = vrot.slane %v2161, 1
      %v2403 = vsel %vm1051, %v2401, %v2402
      %v2404 = vrot.slane %v2158, 1
      %v2405 = vrot.slane %v2162, 1
      %v2406 = vsel %vm1051, %v2404, %v2405
      %v2407 = vrot.slane %v2163, 1
      %v2408 = vsel %vm1051, %v2396, %v2407
      %v2409 = vrot.slane %v2164, 1
      %v2410 = vsel %vm1051, %v2399, %v2409
      %v2411 = vrot.slane %v2165, 1
      %v2412 = vsel %vm1051, %v2402, %v2411
      %v2413 = vrot.slane %v2166, 1
      %v2414 = vsel %vm1051, %v2405, %v2413
      %v2415 = vrot.slane %v2167, 1
      %v2416 = vrot.slane %v2171, 1
      %v2417 = vsel %vm1051, %v2415, %v2416
      %v2418 = vrot.slane %v2168, 1
      %v2419 = vrot.slane %v2172, 1
      %v2420 = vsel %vm1051, %v2418, %v2419
      %v2421 = vrot.slane %v2169, 1
      %v2422 = vrot.slane %v2173, 1
      %v2423 = vsel %vm1051, %v2421, %v2422
      %v2424 = vrot.slane %v2170, 1
      %v2425 = vrot.slane %v2174, 1
      %v2426 = vsel %vm1051, %v2424, %v2425
      %v2427 = vrot.slane %v2175, 1
      %v2428 = vsel %vm1051, %v2416, %v2427
      %v2429 = vrot.slane %v2176, 1
      %v2430 = vsel %vm1051, %v2419, %v2429
      %v2431 = vrot.slane %v2177, 1
      %v2432 = vsel %vm1051, %v2422, %v2431
      %v2433 = vrot.slane %v2178, 1
      %v2434 = vsel %vm1051, %v2425, %v2433
      %s2499 = scalar_lea.vmem %s1, 1536
      %v2500 = vld [vmem:[%s2499] sm:$0xff]
      %v2501 = vld [vmem:[%s2499 + $0x8] sm:$0xff]
      %v2502 = vld [vmem:[%s2499 + $0x10] sm:$0xff]
      %v2503 = vld [vmem:[%s2499 + $0x18] sm:$0xff]
      %v2504 = vld [vmem:[%s2499 + $0x20] sm:$0xff]
      %v2505 = vld [vmem:[%s2499 + $0x28] sm:$0xff]
      %v2506 = vld [vmem:[%s2499 + $0x30] sm:$0xff]
      %v2507 = vld [vmem:[%s2499 + $0x38] sm:$0xff]
      %v2508 = vld [vmem:[%s2499 + $0x40] sm:$0xff]
      %v2509 = vld [vmem:[%s2499 + $0x48] sm:$0xff]
      %v2510 = vld [vmem:[%s2499 + $0x50] sm:$0xff]
      %v2511 = vld [vmem:[%s2499 + $0x58] sm:$0xff]
      %v2512 = vld [vmem:[%s2499 + $0x60] sm:$0xff]
      %v2513 = vld [vmem:[%s2499 + $0x68] sm:$0xff]
      %v2514 = vld [vmem:[%s2499 + $0x70] sm:$0xff]
      %v2515 = vld [vmem:[%s2499 + $0x78] sm:$0xff]
      %v2516 = vld [vmem:[%s2499 + $0x80] sm:$0xff]
      %v2517 = vld [vmem:[%s2499 + $0x88] sm:$0xff]
      %v2518 = vld [vmem:[%s2499 + $0x90] sm:$0xff]
      %v2519 = vld [vmem:[%s2499 + $0x98] sm:$0xff]
      %v2520 = vld [vmem:[%s2499 + $0xa0] sm:$0xff]
      %v2521 = vld [vmem:[%s2499 + $0xa8] sm:$0xff]
      %v2522 = vld [vmem:[%s2499 + $0xb0] sm:$0xff]
      %v2523 = vld [vmem:[%s2499 + $0xb8] sm:$0xff]
      %v2524 = vld [vmem:[%s2499 + $0xc0] sm:$0xff]
      %v2525 = vld [vmem:[%s2499 + $0xc8] sm:$0xff]
      %v2526 = vld [vmem:[%s2499 + $0xd0] sm:$0xff]
      %v2527 = vld [vmem:[%s2499 + $0xd8] sm:$0xff]
      %v2528 = vld [vmem:[%s2499 + $0xe0] sm:$0xff]
      %v2529 = vld [vmem:[%s2499 + $0xe8] sm:$0xff]
      %v2530 = vld [vmem:[%s2499 + $0xf0] sm:$0xff]
      %v2531 = vld [vmem:[%s2499 + $0xf8] sm:$0xff]
      %v2532 = vld [vmem:[%s2499 + $0x100] sm:$0xff]
      %v2533 = vld [vmem:[%s2499 + $0x108] sm:$0xff]
      %v2534 = vld [vmem:[%s2499 + $0x110] sm:$0xff]
      %v2535 = vld [vmem:[%s2499 + $0x118] sm:$0xff]
      %v2536 = vld [vmem:[%s2499 + $0x120] sm:$0xff]
      %v2537 = vld [vmem:[%s2499 + $0x128] sm:$0xff]
      %v2538 = vld [vmem:[%s2499 + $0x130] sm:$0xff]
      %v2539 = vld [vmem:[%s2499 + $0x138] sm:$0xff]
      %v2540 = vld [vmem:[%s2499 + $0x140] sm:$0xff]
      %v2541 = vld [vmem:[%s2499 + $0x148] sm:$0xff]
      %v2542 = vld [vmem:[%s2499 + $0x150] sm:$0xff]
      %v2543 = vld [vmem:[%s2499 + $0x158] sm:$0xff]
      %v2544 = vld [vmem:[%s2499 + $0x160] sm:$0xff]
      %v2545 = vld [vmem:[%s2499 + $0x168] sm:$0xff]
      %v2546 = vld [vmem:[%s2499 + $0x170] sm:$0xff]
      %v2547 = vld [vmem:[%s2499 + $0x178] sm:$0xff]
      %v2548 = vld [vmem:[%s2499 + $0x180] sm:$0xff]
      %v2549 = vld [vmem:[%s2499 + $0x188] sm:$0xff]
      %v2550 = vld [vmem:[%s2499 + $0x190] sm:$0xff]
      %v2551 = vld [vmem:[%s2499 + $0x198] sm:$0xff]
      %v2552 = vld [vmem:[%s2499 + $0x1a0] sm:$0xff]
      %v2553 = vld [vmem:[%s2499 + $0x1a8] sm:$0xff]
      %v2554 = vld [vmem:[%s2499 + $0x1b0] sm:$0xff]
      %v2555 = vld [vmem:[%s2499 + $0x1b8] sm:$0xff]
      %v2556 = vld [vmem:[%s2499 + $0x1c0] sm:$0xff]
      %v2557 = vld [vmem:[%s2499 + $0x1c8] sm:$0xff]
      %v2558 = vld [vmem:[%s2499 + $0x1d0] sm:$0xff]
      %v2559 = vld [vmem:[%s2499 + $0x1d8] sm:$0xff]
      %v2560 = vld [vmem:[%s2499 + $0x1e0] sm:$0xff]
      %v2561 = vld [vmem:[%s2499 + $0x1e8] sm:$0xff]
      %v2562 = vld [vmem:[%s2499 + $0x1f0] sm:$0xff]
      %v2563 = vld [vmem:[%s2499 + $0x1f8] sm:$0xff]
      %2564 = vmatprep.subr.mxu0 0.0
      %2565 = vmatpush1.msra.mxu0 %v2515
      %2566 = vmatprep.subr.mxu0 0.0
      %2567 = vmatpush1.msra.mxu0 %v2514
      %2568 = vmatprep.subr.mxu0 0.0
      %2569 = vmatpush1.msra.mxu0 %v2513
      %2570 = vmatprep.subr.mxu0 0.0
      %2571 = vmatpush1.msra.mxu0 %v2512
      %2572 = vmatprep.subr.mxu0 0.0
      %2573 = vmatpush1.msra.mxu0 %v2511
      %2574 = vmatprep.subr.mxu0 0.0
      %2575 = vmatpush1.msra.mxu0 %v2510
      %2576 = vmatprep.subr.mxu0 0.0
      %2577 = vmatpush1.msra.mxu0 %v2509
      %2578 = vmatprep.subr.mxu0 0.0
      %2579 = vmatpush1.msra.mxu0 %v2508
      %2580 = vmatprep.subr.mxu0 0.0
      %2581 = vmatpush1.msra.mxu0 %v2507
      %2582 = vmatprep.subr.mxu0 0.0
      %2583 = vmatpush1.msra.mxu0 %v2506
      %2584 = vmatprep.subr.mxu0 0.0
      %2585 = vmatpush1.msra.mxu0 %v2505
      %2586 = vmatprep.subr.mxu0 0.0
      %2587 = vmatpush1.msra.mxu0 %v2504
      %2588 = vmatprep.subr.mxu0 0.0
      %2589 = vmatpush1.msra.mxu0 %v2503
      %2590 = vmatprep.subr.mxu0 0.0
      %2591 = vmatpush1.msra.mxu0 %v2502
      %2592 = vmatprep.subr.mxu0 0.0
      %2593 = vmatpush1.msra.mxu0 %v2501
      %2594 = vmatprep.subr.mxu0 0.0
      %2595 = vmatpush1.msra.mxu0 %v2500
      %2596 = vmatprep.subr.mxu0 0.0
      %2597 = vmatpush2.msra.mxu0 %v2531
      %2598 = vmatprep.subr.mxu0 0.0
      %2599 = vmatpush2.msra.mxu0 %v2530
      %2600 = vmatprep.subr.mxu0 0.0
      %2601 = vmatpush2.msra.mxu0 %v2529
      %2602 = vmatprep.subr.mxu0 0.0
      %2603 = vmatpush2.msra.mxu0 %v2528
      %2604 = vmatprep.subr.mxu0 0.0
      %2605 = vmatpush2.msra.mxu0 %v2527
      %2606 = vmatprep.subr.mxu0 0.0
      %2607 = vmatpush2.msra.mxu0 %v2526
      %2608 = vmatprep.subr.mxu0 0.0
      %2609 = vmatpush2.msra.mxu0 %v2525
      %2610 = vmatprep.subr.mxu0 0.0
      %2611 = vmatpush2.msra.mxu0 %v2524
      %2612 = vmatprep.subr.mxu0 0.0
      %2613 = vmatpush2.msra.mxu0 %v2523
      %2614 = vmatprep.subr.mxu0 0.0
      %2615 = vmatpush2.msra.mxu0 %v2522
      %2616 = vmatprep.subr.mxu0 0.0
      %2617 = vmatpush2.msra.mxu0 %v2521
      %2618 = vmatprep.subr.mxu0 0.0
      %2619 = vmatpush2.msra.mxu0 %v2520
      %2620 = vmatprep.subr.mxu0 0.0
      %2621 = vmatpush2.msra.mxu0 %v2519
      %2622 = vmatprep.subr.mxu0 0.0
      %2623 = vmatpush2.msra.mxu0 %v2518
      %2624 = vmatprep.subr.mxu0 0.0
      %2625 = vmatpush2.msra.mxu0 %v2517
      %2626 = vmatprep.subr.mxu0 0.0
      %2627 = vmatpush2.msra.mxu0 %v2516
      %2628 = vmatprep.mubr.f32.mxu0 %v2280
      %2629 = vmatmul.mubr.f32.gmra.mxu0 %v2277
      %v2630 = vpop.f32.mrf.mxu0
      %v2631 = vadd.f32 %v551, %v2630
      %v2632 = vpop.f32.mrf.mxu0
      %2633 = vmatprep.mubr.f32.mxu0 %v2290
      %2634 = vmatmul.mubr.f32.gmra.mxu0 %v2288
      %v2635 = vpop.f32.mrf.mxu0
      %v2636 = vadd.f32 %v551, %v2635
      %v2637 = vpop.f32.mrf.mxu0
      %2638 = vmatprep.mubr.f32.mxu0 %v2300
      %2639 = vmatmul.mubr.f32.gmra.mxu0 %v2297
      %v2640 = vpop.f32.mrf.mxu0
      %v2641 = vadd.f32 %v551, %v2640
      %v2642 = vpop.f32.mrf.mxu0
      %2643 = vmatprep.mubr.f32.mxu0 %v2310
      %2644 = vmatmul.mubr.f32.gmra.mxu0 %v2308
      %v2645 = vpop.f32.mrf.mxu0
      %v2646 = vadd.f32 %v551, %v2645
      %v2647 = vpop.f32.mrf.mxu0
      %2648 = vmatprep.mubr.f32.mxu0 %v2320
      %2649 = vmatmul.mubr.f32.gmra.mxu0 %v2317
      %v2650 = vpop.f32.mrf.mxu0
      %v2651 = vadd.f32 %v551, %v2650
      %v2652 = vpop.f32.mrf.mxu0
      %2653 = vmatprep.mubr.f32.mxu0 %v2330
      %2654 = vmatmul.mubr.f32.gmra.mxu0 %v2328
      %v2655 = vpop.f32.mrf.mxu0
      %v2656 = vadd.f32 %v551, %v2655
      %v2657 = vpop.f32.mrf.mxu0
      %2658 = vmatprep.mubr.f32.mxu0 %v2340
      %2659 = vmatmul.mubr.f32.gmra.mxu0 %v2337
      %v2660 = vpop.f32.mrf.mxu0
      %v2661 = vadd.f32 %v551, %v2660
      %v2662 = vpop.f32.mrf.mxu0
      %2663 = vmatprep.mubr.f32.mxu0 %v2350
      %2664 = vmatmul.mubr.f32.gmra.mxu0 %v2348
      %v2665 = vpop.f32.mrf.mxu0
      %v2666 = vadd.f32 %v551, %v2665
      %v2667 = vpop.f32.mrf.mxu0
      %2668 = vmatprep.mubr.f32.mxu0 %v2360
      %2669 = vmatmul.mubr.f32.gmra.mxu0 %v2357
      %v2670 = vpop.f32.mrf.mxu0
      %v2671 = vadd.f32 %v551, %v2670
      %v2672 = vpop.f32.mrf.mxu0
      %2673 = vmatprep.mubr.f32.mxu0 %v2370
      %2674 = vmatmul.mubr.f32.gmra.mxu0 %v2368
      %v2675 = vpop.f32.mrf.mxu0
      %v2676 = vadd.f32 %v551, %v2675
      %v2677 = vpop.f32.mrf.mxu0
      %2678 = vmatprep.mubr.f32.mxu0 %v2380
      %2679 = vmatmul.mubr.f32.gmra.mxu0 %v2377
      %v2680 = vpop.f32.mrf.mxu0
      %v2681 = vadd.f32 %v551, %v2680
      %v2682 = vpop.f32.mrf.mxu0
      %2683 = vmatprep.mubr.f32.mxu0 %v2390
      %2684 = vmatmul.mubr.f32.gmra.mxu0 %v2388
      %v2685 = vpop.f32.mrf.mxu0
      %v2686 = vadd.f32 %v551, %v2685
      %v2687 = vpop.f32.mrf.mxu0
      %2688 = vmatprep.mubr.f32.mxu0 %v2400
      %2689 = vmatmul.mubr.f32.gmra.mxu0 %v2397
      %v2690 = vpop.f32.mrf.mxu0
      %v2691 = vadd.f32 %v551, %v2690
      %v2692 = vpop.f32.mrf.mxu0
      %2693 = vmatprep.mubr.f32.mxu0 %v2410
      %2694 = vmatmul.mubr.f32.gmra.mxu0 %v2408
      %v2695 = vpop.f32.mrf.mxu0
      %v2696 = vadd.f32 %v551, %v2695
      %v2697 = vpop.f32.mrf.mxu0
      %2698 = vmatprep.mubr.f32.mxu0 %v2420
      %2699 = vmatmul.mubr.f32.gmra.mxu0 %v2417
      %v2700 = vpop.f32.mrf.mxu0
      %v2701 = vadd.f32 %v551, %v2700
      %v2702 = vpop.f32.mrf.mxu0
      %2703 = vmatprep.mubr.f32.mxu0 %v2430
      %2704 = vmatmul.mubr.f32.gmra.mxu0 %v2428
      %v2705 = vpop.f32.mrf.mxu0
      %v2706 = vadd.f32 %v551, %v2705
      %v2707 = vpop.f32.mrf.mxu0
      %2708 = vdwg.mxu0
      %2709 = vmatprep.subr.mxu0 0.0
      %2710 = vmatpush1.msra.mxu0 %v2547
      %2711 = vmatprep.subr.mxu0 0.0
      %2712 = vmatpush1.msra.mxu0 %v2546
      %2713 = vmatprep.subr.mxu0 0.0
      %2714 = vmatpush1.msra.mxu0 %v2545
      %2715 = vmatprep.subr.mxu0 0.0
      %2716 = vmatpush1.msra.mxu0 %v2544
      %2717 = vmatprep.subr.mxu0 0.0
      %2718 = vmatpush1.msra.mxu0 %v2543
      %2719 = vmatprep.subr.mxu0 0.0
      %2720 = vmatpush1.msra.mxu0 %v2542
      %2721 = vmatprep.subr.mxu0 0.0
      %2722 = vmatpush1.msra.mxu0 %v2541
      %2723 = vmatprep.subr.mxu0 0.0
      %2724 = vmatpush1.msra.mxu0 %v2540
      %2725 = vmatprep.subr.mxu0 0.0
      %2726 = vmatpush1.msra.mxu0 %v2539
      %2727 = vmatprep.subr.mxu0 0.0
      %2728 = vmatpush1.msra.mxu0 %v2538
      %2729 = vmatprep.subr.mxu0 0.0
      %2730 = vmatpush1.msra.mxu0 %v2537
      %2731 = vmatprep.subr.mxu0 0.0
      %2732 = vmatpush1.msra.mxu0 %v2536
      %2733 = vmatprep.subr.mxu0 0.0
      %2734 = vmatpush1.msra.mxu0 %v2535
      %2735 = vmatprep.subr.mxu0 0.0
      %2736 = vmatpush1.msra.mxu0 %v2534
      %2737 = vmatprep.subr.mxu0 0.0
      %2738 = vmatpush1.msra.mxu0 %v2533
      %2739 = vmatprep.subr.mxu0 0.0
      %2740 = vmatpush1.msra.mxu0 %v2532
      %2741 = vmatprep.subr.mxu0 0.0
      %2742 = vmatpush2.msra.mxu0 %v2563
      %2743 = vmatprep.subr.mxu0 0.0
      %2744 = vmatpush2.msra.mxu0 %v2562
      %2745 = vmatprep.subr.mxu0 0.0
      %2746 = vmatpush2.msra.mxu0 %v2561
      %2747 = vmatprep.subr.mxu0 0.0
      %2748 = vmatpush2.msra.mxu0 %v2560
      %2749 = vmatprep.subr.mxu0 0.0
      %2750 = vmatpush2.msra.mxu0 %v2559
      %2751 = vmatprep.subr.mxu0 0.0
      %2752 = vmatpush2.msra.mxu0 %v2558
      %2753 = vmatprep.subr.mxu0 0.0
      %2754 = vmatpush2.msra.mxu0 %v2557
      %2755 = vmatprep.subr.mxu0 0.0
      %2756 = vmatpush2.msra.mxu0 %v2556
      %2757 = vmatprep.subr.mxu0 0.0
      %2758 = vmatpush2.msra.mxu0 %v2555
      %2759 = vmatprep.subr.mxu0 0.0
      %2760 = vmatpush2.msra.mxu0 %v2554
      %2761 = vmatprep.subr.mxu0 0.0
      %2762 = vmatpush2.msra.mxu0 %v2553
      %2763 = vmatprep.subr.mxu0 0.0
      %2764 = vmatpush2.msra.mxu0 %v2552
      %2765 = vmatprep.subr.mxu0 0.0
      %2766 = vmatpush2.msra.mxu0 %v2551
      %2767 = vmatprep.subr.mxu0 0.0
      %2768 = vmatpush2.msra.mxu0 %v2550
      %2769 = vmatprep.subr.mxu0 0.0
      %2770 = vmatpush2.msra.mxu0 %v2549
      %2771 = vmatprep.subr.mxu0 0.0
      %2772 = vmatpush2.msra.mxu0 %v2548
      %2773 = vmatprep.mubr.f32.mxu0 %v2286
      %2774 = vmatmul.mubr.f32.gmra.mxu0 %v2283
      %v2775 = vpop.f32.mrf.mxu0
      %v2776 = vadd.f32 %v2631, %v2775
      %v2777 = vpop.f32.mrf.mxu0
      %2778 = vmatprep.mubr.f32.mxu0 %v2294
      %2779 = vmatmul.mubr.f32.gmra.mxu0 %v2292
      %v2780 = vpop.f32.mrf.mxu0
      %v2781 = vadd.f32 %v2636, %v2780
      %v2782 = vpop.f32.mrf.mxu0
      %2783 = vmatprep.mubr.f32.mxu0 %v2306
      %2784 = vmatmul.mubr.f32.gmra.mxu0 %v2303
      %v2785 = vpop.f32.mrf.mxu0
      %v2786 = vadd.f32 %v2641, %v2785
      %v2787 = vpop.f32.mrf.mxu0
      %2788 = vmatprep.mubr.f32.mxu0 %v2314
      %2789 = vmatmul.mubr.f32.gmra.mxu0 %v2312
      %v2790 = vpop.f32.mrf.mxu0
      %v2791 = vadd.f32 %v2646, %v2790
      %v2792 = vpop.f32.mrf.mxu0
      %2793 = vmatprep.mubr.f32.mxu0 %v2326
      %2794 = vmatmul.mubr.f32.gmra.mxu0 %v2323
      %v2795 = vpop.f32.mrf.mxu0
      %v2796 = vadd.f32 %v2651, %v2795
      %v2797 = vpop.f32.mrf.mxu0
      %2798 = vmatprep.mubr.f32.mxu0 %v2334
      %2799 = vmatmul.mubr.f32.gmra.mxu0 %v2332
      %v2800 = vpop.f32.mrf.mxu0
      %v2801 = vadd.f32 %v2656, %v2800
      %v2802 = vpop.f32.mrf.mxu0
      %2803 = vmatprep.mubr.f32.mxu0 %v2346
      %2804 = vmatmul.mubr.f32.gmra.mxu0 %v2343
      %v2805 = vpop.f32.mrf.mxu0
      %v2806 = vadd.f32 %v2661, %v2805
      %v2807 = vpop.f32.mrf.mxu0
      %2808 = vmatprep.mubr.f32.mxu0 %v2354
      %2809 = vmatmul.mubr.f32.gmra.mxu0 %v2352
      %v2810 = vpop.f32.mrf.mxu0
      %v2811 = vadd.f32 %v2666, %v2810
      %v2812 = vpop.f32.mrf.mxu0
      %2813 = vmatprep.mubr.f32.mxu0 %v2366
      %2814 = vmatmul.mubr.f32.gmra.mxu0 %v2363
      %v2815 = vpop.f32.mrf.mxu0
      %v2816 = vadd.f32 %v2671, %v2815
      %v2817 = vpop.f32.mrf.mxu0
      %2818 = vmatprep.mubr.f32.mxu0 %v2374
      %2819 = vmatmul.mubr.f32.gmra.mxu0 %v2372
      %v2820 = vpop.f32.mrf.mxu0
      %v2821 = vadd.f32 %v2676, %v2820
      %v2822 = vpop.f32.mrf.mxu0
      %2823 = vmatprep.mubr.f32.mxu0 %v2386
      %2824 = vmatmul.mubr.f32.gmra.mxu0 %v2383
      %v2825 = vpop.f32.mrf.mxu0
      %v2826 = vadd.f32 %v2681, %v2825
      %v2827 = vpop.f32.mrf.mxu0
      %2828 = vmatprep.mubr.f32.mxu0 %v2394
      %2829 = vmatmul.mubr.f32.gmra.mxu0 %v2392
      %v2830 = vpop.f32.mrf.mxu0
      %v2831 = vadd.f32 %v2686, %v2830
      %v2832 = vpop.f32.mrf.mxu0
      %2833 = vmatprep.mubr.f32.mxu0 %v2406
      %2834 = vmatmul.mubr.f32.gmra.mxu0 %v2403
      %v2835 = vpop.f32.mrf.mxu0
      %v2836 = vadd.f32 %v2691, %v2835
      %v2837 = vpop.f32.mrf.mxu0
      %2838 = vmatprep.mubr.f32.mxu0 %v2414
      %2839 = vmatmul.mubr.f32.gmra.mxu0 %v2412
      %v2840 = vpop.f32.mrf.mxu0
      %v2841 = vadd.f32 %v2696, %v2840
      %v2842 = vpop.f32.mrf.mxu0
      %2843 = vmatprep.mubr.f32.mxu0 %v2426
      %2844 = vmatmul.mubr.f32.gmra.mxu0 %v2423
      %v2845 = vpop.f32.mrf.mxu0
      %v2846 = vadd.f32 %v2701, %v2845
      %v2847 = vpop.f32.mrf.mxu0
      %2848 = vmatprep.mubr.f32.mxu0 %v2434
      %2849 = vmatmul.mubr.f32.gmra.mxu0 %v2432
      %v2850 = vpop.f32.mrf.mxu0
      %v2851 = vadd.f32 %v2706, %v2850
      %v2852 = vpop.f32.mrf.mxu0
      %2853 = vdwg.mxu0
      %2854 = vst [vmem:[%s194 + $0x18] sm:$0xff] %v2776
      %2855 = vst [vmem:[%s194 + $0x38] sm:$0xff] %v2781
      %2856 = vst [vmem:[%s194 + $0x58] sm:$0xff] %v2786
      %2857 = vst [vmem:[%s194 + $0x78] sm:$0xff] %v2791
      %2858 = vst [vmem:[%s194 + $0x98] sm:$0xff] %v2796
      %2859 = vst [vmem:[%s194 + $0xb8] sm:$0xff] %v2801
      %2860 = vst [vmem:[%s194 + $0xd8] sm:$0xff] %v2806
      %2861 = vst [vmem:[%s194 + $0xf8] sm:$0xff] %v2811
      %2862 = vst [vmem:[%s194 + $0x118] sm:$0xff] %v2816
      %2863 = vst [vmem:[%s194 + $0x138] sm:$0xff] %v2821
      %2864 = vst [vmem:[%s194 + $0x158] sm:$0xff] %v2826
      %2865 = vst [vmem:[%s194 + $0x178] sm:$0xff] %v2831
      %2866 = vst [vmem:[%s194 + $0x198] sm:$0xff] %v2836
      %2867 = vst [vmem:[%s194 + $0x1b8] sm:$0xff] %v2841
      %2868 = vst [vmem:[%s194 + $0x1d8] sm:$0xff] %v2846
      %2869 = vst [vmem:[%s194 + $0x1f8] sm:$0xff] %v2851
      %s2870 = smul.u32 8, %s19
      %p2871 = scmp.lt.s32.totalorder %s18, 1
      %s2872 = scalar_select %p2871, %s18, 1
      %p2873 = scmp.lt.s32.totalorder %s2870, 15
      %s2874 = scalar_select %p2873, %s2870, 15
      %s2875 = smul.addr %s2874, 8
      %s2876 = smul.addr %s2872, 128
      %s2877 = sadd.s32 %s2875, %s2876
      %s2878 = smul.addr %s2877, 8
      %s2879 = scalar_lea.vmem %s3, %s2878
      // Predicated region
      $region33: #{upsample_forward.1} parent=31 // pred_check
        %p2880 = pneg %p114
      $region34: #{upsample_forward.1} parent=31 // pred_check_branch
        %2882 = sbr.rel (%p2880) target = $region36
      $region35: #{upsample_forward.1} parent=31 // pred_region
        %s2883 = smul.u32 8, %s19
      $region36: #{upsample_forward.1} parent=31 // pred_fallthru
        _
    $region32: #{upsample_forward.1} parent=5 // pred_fallthru
      _
    %p2884 = scmp.le.s32.totalorder 2, %s9
    // Predicated region
    $region37: #{upsample_forward.1} parent=5 // pred_check
      %p2885 = pneg %p2884
    $region38: #{upsample_forward.1} parent=5 // pred_check_branch
      %2887 = sbr.rel (%p2885) target = $region40
    $region39: #{upsample_forward.1} parent=5 // pred_region
      %s2888 = ssub.s32 %s9, 2
      // Predicated region
      $region41: #{upsample_forward.1} parent=39 // pred_check
        %p2889 = pneg %p120
      $region42: #{upsample_forward.1} parent=39 // pred_check_branch
        %2891 = sbr.rel (%p2889) target = $region44
      $region43: #{upsample_forward.1} parent=39 // pred_region
        %s2892 = smul.u32 8, %s21
        %p2893 = scmp.lt.s32.totalorder %s20, 1
        %s2894 = scalar_select %p2893, %s20, 1
        %p2895 = scmp.lt.s32.totalorder %s2892, 15
        %s2896 = scalar_select %p2895, %s2892, 15
        %s2897 = smul.addr %s2896, 8
        %s2898 = smul.addr %s2894, 128
        %s2899 = sadd.s32 %s2897, %s2898
        %s2900 = smul.addr %s2899, 8
        %s2901 = scalar_lea.vmem %s3, %s2900
      $region44: #{upsample_forward.1} parent=39 // pred_fallthru
        _
    $region40: #{upsample_forward.1} parent=5 // pred_fallthru
      _
  $region6: #{upsample_forward.1} parent=0 // loop_footer
    %s13 = sadd.s32 1, %s9
  $region7: #{upsample_forward.1} parent=0 // loop_footer_branch
    %8 = sbr.rel target = $region3
  $region8: #{upsample_forward.1} parent=0 // loop_exit
    _

</llo_original>
